<compile_context>
chip_gen: v7x
topology: tpu7x:2x2x1
jax: 0.10.0
libtpu: 0.0.40
codegen_flags: <defaults>
</compile_context>

<pallas_src>
import functools

import jax
import jax.numpy as jnp
from jax.experimental import pallas as pl
from jax.experimental.pallas import tpu as pltpu

LANE = 128


def _round_up(x, m):
    return ((x + m - 1) // m) * m


def _pad2(a, rows, cols):
    r, c = a.shape
    return jnp.pad(a.astype(jnp.float32), ((0, rows - r), (0, cols - c)))


# ----------------------------------------------------------------------------
# K1: gate + per-tile column sum-of-squares partials (row axis fully parallel)
# ----------------------------------------------------------------------------
def _gate_kernel(x_ref, w_ref, b_ref, feat_ref, ssp_ref):
    x = x_ref[...]
    s = jnp.dot(x.astype(jnp.bfloat16), w_ref[...],
                preferred_element_type=jnp.float32) + b_ref[...]
    feat = x * jax.nn.sigmoid(s)
    feat_ref[...] = feat
    ssp_ref[...] = jnp.sum(feat * feat, axis=0, keepdims=True)[None, :, :]


def gate_forward(x_p, w_bf, b_p, tm):
    n_pad, d_pad = x_p.shape
    nt = n_pad // tm
    feat, ssp = pl.pallas_call(
        _gate_kernel,
        out_shape=(jax.ShapeDtypeStruct((n_pad, d_pad), jnp.float32),
                   jax.ShapeDtypeStruct((nt, 1, d_pad), jnp.float32)),
        grid=(nt,),
        in_specs=[pl.BlockSpec((tm, d_pad), lambda i: (i, 0)),
                  pl.BlockSpec((d_pad, d_pad), lambda i: (0, 0)),
                  pl.BlockSpec((1, d_pad), lambda i: (0, 0))],
        out_specs=(pl.BlockSpec((tm, d_pad), lambda i: (i, 0)),
                   pl.BlockSpec((1, 1, d_pad), lambda i: (i, 0, 0))),
        compiler_params=pltpu.CompilerParams(dimension_semantics=("parallel",)),
    )(x_p, w_bf, b_p)
    ss = jnp.sum(ssp, axis=0)          # (1, d_pad): tiny reduce in plain JAX
    return feat, ss


# ----------------------------------------------------------------------------
# K2: column L2-normalize + similarity (fused); padded columns masked to -inf
# ----------------------------------------------------------------------------
def _norm_sim_kernel(fi_ref, fj_ref, ss_ref, sim_ref, xn_ref, *, n_valid):
    inv = 1.0 / jnp.maximum(jnp.sqrt(ss_ref[...]), 1e-12)
    xi = fi_ref[...] * inv
    xj = fj_ref[...] * inv
    s = jax.lax.dot_general(
        xi.astype(jnp.bfloat16), xj.astype(jnp.bfloat16),
        dimension_numbers=(((1,), (1,)), ((), ())),
        preferred_element_type=jnp.float32)
    j = pl.program_id(1)
    col = j * s.shape[1] + jax.lax.broadcasted_iota(jnp.int32, s.shape, 1)
    sim_ref[...] = jnp.where(col < n_valid, s, -jnp.inf)

    @pl.when(j == 0)
    def _():
        xn_ref[...] = xi


def norm_similarity(feat, ss, tm, n_valid):
    n_pad, d_pad = feat.shape
    nt = n_pad // tm
    kern = functools.partial(_norm_sim_kernel, n_valid=n_valid)
    return pl.pallas_call(
        kern,
        out_shape=(jax.ShapeDtypeStruct((n_pad, n_pad), jnp.float32),
                   jax.ShapeDtypeStruct((n_pad, d_pad), jnp.float32)),
        grid=(nt, nt),
        in_specs=[pl.BlockSpec((tm, d_pad), lambda i, j: (i, 0)),
                  pl.BlockSpec((tm, d_pad), lambda i, j: (j, 0)),
                  pl.BlockSpec((1, d_pad), lambda i, j: (0, 0))],
        out_specs=(pl.BlockSpec((tm, tm), lambda i, j: (i, j)),
                   pl.BlockSpec((tm, d_pad), lambda i, j: (i, 0))),
        compiler_params=pltpu.CompilerParams(
            dimension_semantics=("parallel", "arbitrary")),
    )(feat, feat, ss)


# ----------------------------------------------------------------------------
# K3: symmetrize + degrees; emits f32 A_sym (adj_gen) and bf16 (A_sym + I)
# ----------------------------------------------------------------------------
def _sym_deg_kernel(aij_ref, aji_ref, asym_ref, asym_i_ref, deg_ref):
    a = jnp.maximum(aij_ref[...], aji_ref[...].T)
    asym_ref[...] = a

    i = pl.program_id(0)
    j = pl.program_id(1)
    rows = jax.lax.broadcasted_iota(jnp.int32, a.shape, 0)
    cols = jax.lax.broadcasted_iota(jnp.int32, a.shape, 1)
    eye = (rows == cols).astype(jnp.float32)
    asym_i_ref[...] = jnp.where(i == j, a + eye, a).astype(jnp.bfloat16)

    @pl.when(j == 0)
    def _():
        deg_ref[...] = jnp.ones_like(deg_ref)      # +1 accounts for the self-loop

    deg_ref[...] += jnp.sum(a, axis=1, keepdims=True)


def sym_deg(adj, tm):
    n_pad = adj.shape[0]
    nt = n_pad // tm
    return pl.pallas_call(
        _sym_deg_kernel,
        out_shape=(jax.ShapeDtypeStruct((n_pad, n_pad), jnp.float32),
                   jax.ShapeDtypeStruct((n_pad, n_pad), jnp.bfloat16),
                   jax.ShapeDtypeStruct((n_pad, 1), jnp.float32)),
        grid=(nt, nt),
        in_specs=[pl.BlockSpec((tm, tm), lambda i, j: (i, j)),
                  pl.BlockSpec((tm, tm), lambda i, j: (j, i))],
        out_specs=(pl.BlockSpec((tm, tm), lambda i, j: (i, j)),
                   pl.BlockSpec((tm, tm), lambda i, j: (i, j)),
                   pl.BlockSpec((tm, 1), lambda i, j: (i, 0))),
        compiler_params=pltpu.CompilerParams(
            dimension_semantics=("parallel", "arbitrary")),
    )(adj, adj)


# ----------------------------------------------------------------------------
# K4: HW = D^-1/2 * (H @ W), emitted in bf16 (normalization folded here)
# ----------------------------------------------------------------------------
def _hw_kernel(h_ref, w_ref, dinv_ref, o_ref):
    hw = jnp.dot(h_ref[...].astype(jnp.bfloat16), w_ref[...],
                 preferred_element_type=jnp.float32)
    o_ref[...] = (dinv_ref[...] * hw).astype(jnp.bfloat16)


def feature_matmul_scaled(h, w_bf, d_inv, tm):
    n_pad, din_pad = h.shape
    dout_pad = w_bf.shape[1]
    return pl.pallas_call(
        _hw_kernel,
        out_shape=jax.ShapeDtypeStruct((n_pad, dout_pad), jnp.bfloat16),
        grid=(n_pad // tm,),
        in_specs=[pl.BlockSpec((tm, din_pad), lambda i: (i, 0)),
                  pl.BlockSpec((din_pad, dout_pad), lambda i: (0, 0)),
                  pl.BlockSpec((tm, 1), lambda i: (i, 0))],
        out_specs=pl.BlockSpec((tm, dout_pad), lambda i: (i, 0)),
        compiler_params=pltpu.CompilerParams(dimension_semantics=("parallel",)),
    )(h, w_bf, d_inv)


# ----------------------------------------------------------------------------
# K5: GCN propagation — clean K-tiled bf16 matmul with fused finalize
# ----------------------------------------------------------------------------
def _propagate_kernel(a_ref, hw_ref, drow_ref, b_ref, o_ref, acc_ref, *, activate):
    k = pl.program_id(1)

    @pl.when(k == 0)
    def _():
        acc_ref[...] = jnp.zeros_like(acc_ref)

    acc_ref[...] += jnp.dot(a_ref[...], hw_ref[...],
                            preferred_element_type=jnp.float32)

    @pl.when(k == pl.num_programs(1) - 1)
    def _():
        out = drow_ref[...] * acc_ref[...] + b_ref[...]
        if activate:
            out = jnp.maximum(out, 0.0)
        o_ref[...] = out


def gcn_propagate(a_sym_i_bf, d_inv, hw_scaled, b_p, tm, tk, activate):
    n_pad = a_sym_i_bf.shape[0]
    dout_pad = hw_scaled.shape[1]
    kern = functools.partial(_propagate_kernel, activate=activate)
    return pl.pallas_call(
        kern,
        out_shape=jax.ShapeDtypeStruct((n_pad, dout_pad), jnp.float32),
        grid=(n_pad // tm, n_pad // tk),
        in_specs=[pl.BlockSpec((tm, tk), lambda i, k: (i, k)),
                  pl.BlockSpec((tk, dout_pad), lambda i, k: (k, 0)),
                  pl.BlockSpec((tm, 1), lambda i, k: (i, 0)),
                  pl.BlockSpec((1, dout_pad), lambda i, k: (0, 0))],
        out_specs=pl.BlockSpec((tm, dout_pad), lambda i, k: (i, 0)),
        scratch_shapes=[pltpu.VMEM((tm, dout_pad), jnp.float32)],
        compiler_params=pltpu.CompilerParams(
            dimension_semantics=("parallel", "arbitrary")),
    )(a_sym_i_bf, hw_scaled, d_inv, b_p)


# ----------------------------------------------------------------------------
# Parameters + forward
# ----------------------------------------------------------------------------
def init_params(key, encoder_li_dim):
    d0 = encoder_li_dim[0]
    keys = jax.random.split(key, len(encoder_li_dim))

    def glorot(kk, shape):
        lim = jnp.sqrt(6.0 / (shape[0] + shape[1]))
        return jax.random.uniform(kk, shape, jnp.float32, -lim, lim)

    params = {
        "w_gate": glorot(keys[0], (d0, d0)),
        "b_gate": jnp.zeros((1, d0), jnp.float32),
        "encoder": [],
    }
    for li, (din, dout) in enumerate(zip(encoder_li_dim[:-1], encoder_li_dim[1:])):
        params["encoder"].append((glorot(keys[1 + li], (din, dout)),
                                  jnp.zeros((1, dout), jnp.float32)))
    return params


def agl_mgae_forward(params, x, k=10):
    """Inference path of AglMGae.forward (Training=False)."""
    n, d0 = x.shape
    n_pad = _round_up(n, LANE)
    # Lane-facing block dims never drop below 128; prefer 256-wide M tiles when
    # they divide (fills the 256-wide MXU on v6e/v7x); larger K-tile in K5 to
    # amortize per-grid-step overhead.
    tm = 256 if n_pad % 256 == 0 else 128
    tk = 512 if n_pad % 512 == 0 else (256 if n_pad % 256 == 0 else 128)

    d0_pad = _round_up(d0, LANE)
    x_p = _pad2(x, n_pad, d0_pad)
    wg_bf = _pad2(params["w_gate"], d0_pad, d0_pad).astype(jnp.bfloat16)
    bg_p = _pad2(params["b_gate"], 1, d0_pad)

    # gate + column sum-of-squares (fused)
    feat, ss = gate_forward(x_p, wg_bf, bg_p, tm)

    # column L2 normalization (F.normalize dim=0) + similarity; emits X_n too
    sim, xn = norm_similarity(feat, ss, tm, n)

    # kNN graph construction directly on the padded array (padded cols = -inf)
    # TODO(synk): no Pallas top-k primitive; top-k + scatter stay in plain JAX.
    vals, idx = jax.lax.top_k(sim, k)
    adj_p = jnp.zeros((n_pad, n_pad), jnp.float32).at[
        jnp.arange(n_pad)[:, None], idx].set(vals)

    # symmetrize + degrees in one pass; bf16 (A_sym + I) for the GCN layers
    a_sym, a_sym_i, deg = sym_deg(adj_p, tm)
    d_inv = 1.0 / jnp.sqrt(jnp.maximum(deg, 1e-12))        # (n_pad, 1)
    adj_gen = a_sym[:n, :n]

    # GCN encoder: H' = act(D^-1/2 (A_sym + I) D^-1/2 @ (H @ W) + b)
    feat_emb_gcn = []
    h = xn
    n_layers = len(params["encoder"])
    for li, (w, b) in enumerate(params["encoder"]):
        din, dout = w.shape
        din_pad = _round_up(din, LANE)
        dout_pad = _round_up(dout, LANE)
        w_bf = _pad2(w, din_pad, dout_pad).astype(jnp.bfloat16)
        b_p = _pad2(b, 1, dout_pad)
        hw = feature_matmul_scaled(h, w_bf, d_inv, tm)     # bf16, pre-scaled
        h = gcn_propagate(a_sym_i, d_inv, hw, b_p, tm, tk,
                          activate=(li < n_layers - 1))
        feat_emb_gcn.append(h[:n, :dout])

    # TODO(synk): Training branch (label-grouped random masking via pandas +
    # torch.randperm, encoder_to_decoder, decoder, sce_loss) is not exercised
    # in the Training=False path and has no clean Pallas equivalent.
    loss = {}
    return feat_emb_gcn, loss, adj_gen


if __name__ == "__main__":
    N, D_IN = 128, 32
    ENCODER_LI_DIM = [32, 64, 32]
    K = 10

    key = jax.random.PRNGKey(0)
    kx, kp = jax.random.split(key)
    x = jax.random.normal(kx, (N, D_IN), dtype=jnp.float32)
    params = init_params(kp, ENCODER_LI_DIM)

    fwd = jax.jit(functools.partial(agl_mgae_forward, k=K))
    feat_emb_gcn, loss, adj_gen = fwd(params, x)

    jax.block_until_ready(feat_emb_gcn[-1])
    jax.block_until_ready(adj_gen)

    assert feat_emb_gcn[0].shape == (N, ENCODER_LI_DIM[1])
    assert feat_emb_gcn[-1].shape == (N, ENCODER_LI_DIM[-1])
    assert adj_gen.shape == (N, N)
    assert loss == {}
    print("KERNEL_OK")
</pallas_src>

<mosaic_0001>
module attributes {stable_mosaic.version = 11 : i64} {
  func.func @_norm_sim_kernel(%arg0: i32, %arg1: i32, %arg2: memref<128x128xf32, #tpu.memory_space<vmem>>, %arg3: memref<128x128xf32, #tpu.memory_space<vmem>>, %arg4: memref<1x128xf32, #tpu.memory_space<vmem>>, %arg5: memref<128x128xf32, #tpu.memory_space<vmem>>, %arg6: memref<128x128xf32, #tpu.memory_space<vmem>>) attributes {dimension_semantics = [#tpu.dimension_semantics<parallel>, #tpu.dimension_semantics<arbitrary>], iteration_bounds = array<i64: 1, 1>, scalar_prefetch = 0 : i64, scratch_operands = 0 : i64, tpu.core_type = #tpu.core_type<tc>, window_params = [{transform_indices = @transform_0, window_bounds = array<i64: 128, 128>}, {transform_indices = @transform_1, window_bounds = array<i64: 128, 128>}, {pipeline_mode = #tpu.pipeline_mode<synchronous>, transform_indices = @transform_2, window_bounds = array<i64: 1, 128>}, {transform_indices = @transform_3, window_bounds = array<i64: 128, 128>}, {transform_indices = @transform_4, window_bounds = array<i64: 128, 128>}]} {
    %c0 = arith.constant 0 : index
    %c0_0 = arith.constant 0 : index
    %0 = vector.load %arg4[%c0, %c0_0] : memref<1x128xf32, #tpu.memory_space<vmem>>, vector<1x128xf32>
    %1 = math.sqrt %0 : vector<1x128xf32>
    %cst = arith.constant 9.99999996E-13 : f32
    %2 = vector.broadcast %cst : f32 to vector<1x128xf32>
    %3 = arith.maximumf %1, %2 : vector<1x128xf32>
    %cst_1 = arith.constant 1.000000e+00 : f32
    %4 = vector.broadcast %cst_1 : f32 to vector<1x128xf32>
    %5 = arith.divf %4, %3 : vector<1x128xf32>
    %c0_2 = arith.constant 0 : index
    %c0_3 = arith.constant 0 : index
    %6 = vector.load %arg2[%c0_2, %c0_3] : memref<128x128xf32, #tpu.memory_space<vmem>>, vector<128x128xf32>
    %7 = vector.broadcast %5 : vector<1x128xf32> to vector<128x128xf32>
    %8 = arith.mulf %6, %7 : vector<128x128xf32>
    %c0_4 = arith.constant 0 : index
    %c0_5 = arith.constant 0 : index
    %9 = vector.load %arg3[%c0_4, %c0_5] : memref<128x128xf32, #tpu.memory_space<vmem>>, vector<128x128xf32>
    %10 = vector.broadcast %5 : vector<1x128xf32> to vector<128x128xf32>
    %11 = arith.mulf %9, %10 : vector<128x128xf32>
    %12 = arith.truncf %8 : vector<128x128xf32> to vector<128x128xbf16>
    %13 = arith.truncf %11 : vector<128x128xf32> to vector<128x128xbf16>
    %cst_6 = arith.constant dense<0.000000e+00> : vector<128x128xf32>
    %14 = tpu.matmul %12, %13, %cst_6 {dimension_numbers = #tpu.dot_dimension_numbers<[1], [1], [0], [0], [0, 0, 1, 0], [], []>} : vector<128x128xbf16>, vector<128x128xbf16>, vector<128x128xf32> -> vector<128x128xf32>
    %c128_i32 = arith.constant 128 : i32
    %15 = arith.muli %arg1, %c128_i32 : i32
    %16 = tpu.iota {dimensions = array<i32: 1>} : vector<128x128xi32>
    %17 = vector.broadcast %15 : i32 to vector<128x128xi32>
    %18 = arith.addi %17, %16 : vector<128x128xi32>
    %c128_i32_7 = arith.constant 128 : i32
    %19 = vector.broadcast %c128_i32_7 : i32 to vector<128x128xi32>
    %20 = arith.cmpi slt, %18, %19 : vector<128x128xi32>
    %cst_8 = arith.constant 0xFF800000 : f32
    %21 = vector.broadcast %cst_8 : f32 to vector<128x128xf32>
    %22 = arith.select %20, %14, %21 : vector<128x128xi1>, vector<128x128xf32>
    %c0_9 = arith.constant 0 : index
    %c0_10 = arith.constant 0 : index
    %23 = vector.load %arg5[%c0_9, %c0_10] : memref<128x128xf32, #tpu.memory_space<vmem>>, vector<128x128xf32>
    tpu.vector_store %arg5[%c0_9, %c0_10], %22 {strides = array<i32>} : memref<128x128xf32, #tpu.memory_space<vmem>>, vector<128x128xf32>,
    %c0_i32 = arith.constant 0 : i32
    %24 = arith.cmpi eq, %arg1, %c0_i32 : i32
    %25 = arith.extui %24 : i1 to i32
    %c0_i32_11 = arith.constant 0 : i32
    %26 = arith.cmpi ne, %25, %c0_i32_11 : i32
    scf.if %26 {
      %c0_12 = arith.constant 0 : index
      %c0_13 = arith.constant 0 : index
      %27 = vector.load %arg6[%c0_12, %c0_13] : memref<128x128xf32, #tpu.memory_space<vmem>>, vector<128x128xf32>
      tpu.vector_store %arg6[%c0_12, %c0_13], %8 {strides = array<i32>} : memref<128x128xf32, #tpu.memory_space<vmem>>, vector<128x128xf32>,
    } else {
    }
    return
  }
  func.func @transform_0(%arg0: i32, %arg1: i32) -> (i32, i32) {
    %c0_i32 = arith.constant 0 : i32
    %c0_i32_0 = arith.constant 0 : i32
    return %arg0, %c0_i32 : i32, i32
  }
  func.func @transform_1(%arg0: i32, %arg1: i32) -> (i32, i32) {
    %c0_i32 = arith.constant 0 : i32
    %c0_i32_0 = arith.constant 0 : i32
    return %arg1, %c0_i32 : i32, i32
  }
  func.func @transform_2(%arg0: i32, %arg1: i32) -> (i32, i32) {
    %c0_i32 = arith.constant 0 : i32
    %c0_i32_0 = arith.constant 0 : i32
    %c0_i32_1 = arith.constant 0 : i32
    return %c0_i32, %c0_i32_0 : i32, i32
  }
  func.func @transform_3(%arg0: i32, %arg1: i32) -> (i32, i32) {
    %c0_i32 = arith.constant 0 : i32
    return %arg0, %arg1 : i32, i32
  }
  func.func @transform_4(%arg0: i32, %arg1: i32) -> (i32, i32) {
    %c0_i32 = arith.constant 0 : i32
    %c0_i32_0 = arith.constant 0 : i32
    return %arg0, %c0_i32 : i32, i32
  }
}

module attributes {stable_mosaic.version = 11 : i64} {
  func.func @_gate_kernel(%arg0: i32, %arg1: memref<128x128xf32, #tpu.memory_space<vmem>>, %arg2: memref<128x128xbf16, #tpu.memory_space<vmem>>, %arg3: memref<1x128xf32, #tpu.memory_space<vmem>>, %arg4: memref<128x128xf32, #tpu.memory_space<vmem>>, %arg5: memref<1x1x128xf32, #tpu.memory_space<vmem>>) attributes {dimension_semantics = [#tpu.dimension_semantics<parallel>], iteration_bounds = array<i64: 1>, scalar_prefetch = 0 : i64, scratch_operands = 0 : i64, tpu.core_type = #tpu.core_type<tc>, window_params = [{transform_indices = @transform_0, window_bounds = array<i64: 128, 128>}, {pipeline_mode = #tpu.pipeline_mode<synchronous>, transform_indices = @transform_1, window_bounds = array<i64: 128, 128>}, {pipeline_mode = #tpu.pipeline_mode<synchronous>, transform_indices = @transform_2, window_bounds = array<i64: 1, 128>}, {transform_indices = @transform_3, window_bounds = array<i64: 128, 128>}, {transform_indices = @transform_4, window_bounds = array<i64: 1, 1, 128>}]} {
    %c0 = arith.constant 0 : index
    %c0_0 = arith.constant 0 : index
    %0 = vector.load %arg1[%c0, %c0_0] : memref<128x128xf32, #tpu.memory_space<vmem>>, vector<128x128xf32>
    %1 = arith.truncf %0 : vector<128x128xf32> to vector<128x128xbf16>
    %c0_1 = arith.constant 0 : index
    %c0_2 = arith.constant 0 : index
    %2 = vector.load %arg2[%c0_1, %c0_2] : memref<128x128xbf16, #tpu.memory_space<vmem>>, vector<128x128xbf16>
    %cst = arith.constant dense<0.000000e+00> : vector<128x128xf32>
    %3 = tpu.matmul %1, %2, %cst {dimension_numbers = #tpu.dot_dimension_numbers<[1], [0], [0], [1], [0, 0, 1, 1], [], []>} : vector<128x128xbf16>, vector<128x128xbf16>, vector<128x128xf32> -> vector<128x128xf32>
    %c0_3 = arith.constant 0 : index
    %c0_4 = arith.constant 0 : index
    %4 = vector.load %arg3[%c0_3, %c0_4] : memref<1x128xf32, #tpu.memory_space<vmem>>, vector<1x128xf32>
    %5 = vector.broadcast %4 : vector<1x128xf32> to vector<128x128xf32>
    %6 = arith.addf %3, %5 : vector<128x128xf32>
    %7 = arith.negf %6 : vector<128x128xf32>
    %8 = math.exp %7 : vector<128x128xf32>
    %cst_5 = arith.constant 1.000000e+00 : f32
    %9 = vector.broadcast %cst_5 : f32 to vector<128x128xf32>
    %10 = arith.addf %9, %8 : vector<128x128xf32>
    %11 = arith.divf %9, %10 : vector<128x128xf32>
    %12 = arith.mulf %0, %11 : vector<128x128xf32>
    %c0_6 = arith.constant 0 : index
    %c0_7 = arith.constant 0 : index
    %13 = vector.load %arg4[%c0_6, %c0_7] : memref<128x128xf32, #tpu.memory_space<vmem>>, vector<128x128xf32>
    tpu.vector_store %arg4[%c0_6, %c0_7], %12 {strides = array<i32>} : memref<128x128xf32, #tpu.memory_space<vmem>>, vector<128x128xf32>,
    %14 = arith.mulf %12, %12 : vector<128x128xf32>
    %cst_8 = arith.constant dense<0.000000e+00> : vector<128xf32>
    %15 = vector.multi_reduction <add>, %14, %cst_8 [0] : vector<128x128xf32> to vector<128xf32>
    %16 = vector.shape_cast %15 : vector<128xf32> to vector<1x128xf32>
    %17 = vector.shape_cast %16 : vector<1x128xf32> to vector<1x1x128xf32>
    %c0_9 = arith.constant 0 : index
    %c0_10 = arith.constant 0 : index
    %c0_11 = arith.constant 0 : index
    %18 = vector.load %arg5[%c0_9, %c0_10, %c0_11] : memref<1x1x128xf32, #tpu.memory_space<vmem>>, vector<1x1x128xf32>
    tpu.vector_store %arg5[%c0_9, %c0_10, %c0_11], %17 {strides = array<i32>} : memref<1x1x128xf32, #tpu.memory_space<vmem>>, vector<1x1x128xf32>,
    return
  }
  func.func @transform_0(%arg0: i32) -> (i32, i32) {
    %c0_i32 = arith.constant 0 : i32
    %c0_i32_0 = arith.constant 0 : i32
    return %arg0, %c0_i32 : i32, i32
  }
  func.func @transform_1(%arg0: i32) -> (i32, i32) {
    %c0_i32 = arith.constant 0 : i32
    %c0_i32_0 = arith.constant 0 : i32
    %c0_i32_1 = arith.constant 0 : i32
    return %c0_i32, %c0_i32_0 : i32, i32
  }
  func.func @transform_2(%arg0: i32) -> (i32, i32) {
    %c0_i32 = arith.constant 0 : i32
    %c0_i32_0 = arith.constant 0 : i32
    %c0_i32_1 = arith.constant 0 : i32
    return %c0_i32, %c0_i32_0 : i32, i32
  }
  func.func @transform_3(%arg0: i32) -> (i32, i32) {
    %c0_i32 = arith.constant 0 : i32
    %c0_i32_0 = arith.constant 0 : i32
    return %arg0, %c0_i32 : i32, i32
  }
  func.func @transform_4(%arg0: i32) -> (i32, i32, i32) {
    %c0_i32 = arith.constant 0 : i32
    %c0_i32_0 = arith.constant 0 : i32
    %c0_i32_1 = arith.constant 0 : i32
    return %arg0, %c0_i32, %c0_i32_0 : i32, i32, i32
  }
}

module attributes {stable_mosaic.version = 11 : i64} {
  func.func @_sym_deg_kernel(%arg0: i32, %arg1: i32, %arg2: memref<128x128xf32, #tpu.memory_space<vmem>>, %arg3: memref<128x128xf32, #tpu.memory_space<vmem>>, %arg4: memref<128x128xf32, #tpu.memory_space<vmem>>, %arg5: memref<128x128xbf16, #tpu.memory_space<vmem>>, %arg6: memref<128x1xf32, #tpu.memory_space<vmem>>) attributes {dimension_semantics = [#tpu.dimension_semantics<parallel>, #tpu.dimension_semantics<arbitrary>], iteration_bounds = array<i64: 1, 1>, scalar_prefetch = 0 : i64, scratch_operands = 0 : i64, tpu.core_type = #tpu.core_type<tc>, window_params = [{transform_indices = @transform_0, window_bounds = array<i64: 128, 128>}, {transform_indices = @transform_1, window_bounds = array<i64: 128, 128>}, {transform_indices = @transform_2, window_bounds = array<i64: 128, 128>}, {transform_indices = @transform_3, window_bounds = array<i64: 128, 128>}, {transform_indices = @transform_4, window_bounds = array<i64: 128, 1>}]} {
    %c0 = arith.constant 0 : index
    %c0_0 = arith.constant 0 : index
    %0 = vector.load %arg2[%c0, %c0_0] : memref<128x128xf32, #tpu.memory_space<vmem>>, vector<128x128xf32>
    %c0_1 = arith.constant 0 : index
    %c0_2 = arith.constant 0 : index
    %1 = vector.load %arg3[%c0_1, %c0_2] : memref<128x128xf32, #tpu.memory_space<vmem>>, vector<128x128xf32>
    %2 = tpu.transpose %1, [1, 0] : vector<128x128xf32> -> vector<128x128xf32>
    %3 = arith.maximumf %0, %2 : vector<128x128xf32>
    %c0_3 = arith.constant 0 : index
    %c0_4 = arith.constant 0 : index
    %4 = vector.load %arg4[%c0_3, %c0_4] : memref<128x128xf32, #tpu.memory_space<vmem>>, vector<128x128xf32>
    tpu.vector_store %arg4[%c0_3, %c0_4], %3 {strides = array<i32>} : memref<128x128xf32, #tpu.memory_space<vmem>>, vector<128x128xf32>,
    %5 = tpu.iota {dimensions = array<i32: 0>} : vector<128x128xi32>
    %6 = tpu.iota {dimensions = array<i32: 1>} : vector<128x128xi32>
    %7 = arith.cmpi eq, %5, %6 : vector<128x128xi32>
    %8 = arith.extui %7 : vector<128x128xi1> to vector<128x128xi32>
    %9 = arith.sitofp %8 : vector<128x128xi32> to vector<128x128xf32>
    %10 = arith.cmpi eq, %arg0, %arg1 : i32
    %11 = arith.addf %3, %9 : vector<128x128xf32>
    %12 = arith.select %10, %11, %3 : vector<128x128xf32>
    %13 = arith.truncf %12 : vector<128x128xf32> to vector<128x128xbf16>
    %c0_5 = arith.constant 0 : index
    %c0_6 = arith.constant 0 : index
    %14 = vector.load %arg5[%c0_5, %c0_6] : memref<128x128xbf16, #tpu.memory_space<vmem>>, vector<128x128xbf16>
    tpu.vector_store %arg5[%c0_5, %c0_6], %13 {strides = array<i32>} : memref<128x128xbf16, #tpu.memory_space<vmem>>, vector<128x128xbf16>,
    %c0_i32 = arith.constant 0 : i32
    %15 = arith.cmpi eq, %arg1, %c0_i32 : i32
    %16 = arith.extui %15 : i1 to i32
    %c0_i32_7 = arith.constant 0 : i32
    %17 = arith.cmpi ne, %16, %c0_i32_7 : i32
    scf.if %17 {
      %cst_12 = arith.constant 1.000000e+00 : f32
      %23 = vector.broadcast %cst_12 : f32 to vector<128x1xf32>
      %c0_13 = arith.constant 0 : index
      %c0_14 = arith.constant 0 : index
      %24 = vector.load %arg6[%c0_13, %c0_14] : memref<128x1xf32, #tpu.memory_space<vmem>>, vector<128x1xf32>
      tpu.vector_store %arg6[%c0_13, %c0_14], %23 {strides = array<i32>} : memref<128x1xf32, #tpu.memory_space<vmem>>, vector<128x1xf32>,
    } else {
    }
    %c0_8 = arith.constant 0 : index
    %c0_9 = arith.constant 0 : index
    %18 = vector.load %arg6[%c0_8, %c0_9] : memref<128x1xf32, #tpu.memory_space<vmem>>, vector<128x1xf32>
    %cst = arith.constant dense<0.000000e+00> : vector<128xf32>
    %19 = vector.multi_reduction <add>, %3, %cst [1] : vector<128x128xf32> to vector<128xf32>
    %20 = vector.shape_cast %19 : vector<128xf32> to vector<128x1xf32>
    %21 = arith.addf %18, %20 : vector<128x1xf32>
    %c0_10 = arith.constant 0 : index
    %c0_11 = arith.constant 0 : index
    %22 = vector.load %arg6[%c0_10, %c0_11] : memref<128x1xf32, #tpu.memory_space<vmem>>, vector<128x1xf32>
    tpu.vector_store %arg6[%c0_10, %c0_11], %21 {strides = array<i32>} : memref<128x1xf32, #tpu.memory_space<vmem>>, vector<128x1xf32>,
    return
  }
  func.func @transform_0(%arg0: i32, %arg1: i32) -> (i32, i32) {
    %c0_i32 = arith.constant 0 : i32
    return %arg0, %arg1 : i32, i32
  }
  func.func @transform_1(%arg0: i32, %arg1: i32) -> (i32, i32) {
    %c0_i32 = arith.constant 0 : i32
    return %arg1, %arg0 : i32, i32
  }
  func.func @transform_2(%arg0: i32, %arg1: i32) -> (i32, i32) {
    %c0_i32 = arith.constant 0 : i32
    return %arg0, %arg1 : i32, i32
  }
  func.func @transform_3(%arg0: i32, %arg1: i32) -> (i32, i32) {
    %c0_i32 = arith.constant 0 : i32
    return %arg0, %arg1 : i32, i32
  }
  func.func @transform_4(%arg0: i32, %arg1: i32) -> (i32, i32) {
    %c0_i32 = arith.constant 0 : i32
    %c0_i32_0 = arith.constant 0 : i32
    return %arg0, %c0_i32 : i32, i32
  }
}

module attributes {stable_mosaic.version = 11 : i64} {
  func.func @_hw_kernel(%arg0: i32, %arg1: memref<128x128xf32, #tpu.memory_space<vmem>>, %arg2: memref<128x128xbf16, #tpu.memory_space<vmem>>, %arg3: memref<128x1xf32, #tpu.memory_space<vmem>>, %arg4: memref<128x128xbf16, #tpu.memory_space<vmem>>) attributes {dimension_semantics = [#tpu.dimension_semantics<parallel>], iteration_bounds = array<i64: 1>, scalar_prefetch = 0 : i64, scratch_operands = 0 : i64, tpu.core_type = #tpu.core_type<tc>, window_params = [{transform_indices = @transform_0, window_bounds = array<i64: 128, 128>}, {pipeline_mode = #tpu.pipeline_mode<synchronous>, transform_indices = @transform_1, window_bounds = array<i64: 128, 128>}, {transform_indices = @transform_2, window_bounds = array<i64: 128, 1>}, {transform_indices = @transform_3, window_bounds = array<i64: 128, 128>}]} {
    %c0 = arith.constant 0 : index
    %c0_0 = arith.constant 0 : index
    %0 = vector.load %arg1[%c0, %c0_0] : memref<128x128xf32, #tpu.memory_space<vmem>>, vector<128x128xf32>
    %1 = arith.truncf %0 : vector<128x128xf32> to vector<128x128xbf16>
    %c0_1 = arith.constant 0 : index
    %c0_2 = arith.constant 0 : index
    %2 = vector.load %arg2[%c0_1, %c0_2] : memref<128x128xbf16, #tpu.memory_space<vmem>>, vector<128x128xbf16>
    %cst = arith.constant dense<0.000000e+00> : vector<128x128xf32>
    %3 = tpu.matmul %1, %2, %cst {dimension_numbers = #tpu.dot_dimension_numbers<[1], [0], [0], [1], [0, 0, 1, 1], [], []>} : vector<128x128xbf16>, vector<128x128xbf16>, vector<128x128xf32> -> vector<128x128xf32>
    %c0_3 = arith.constant 0 : index
    %c0_4 = arith.constant 0 : index
    %4 = vector.load %arg3[%c0_3, %c0_4] : memref<128x1xf32, #tpu.memory_space<vmem>>, vector<128x1xf32>
    %5 = vector.broadcast %4 : vector<128x1xf32> to vector<128x128xf32>
    %6 = arith.mulf %5, %3 : vector<128x128xf32>
    %7 = arith.truncf %6 : vector<128x128xf32> to vector<128x128xbf16>
    %c0_5 = arith.constant 0 : index
    %c0_6 = arith.constant 0 : index
    %8 = vector.load %arg4[%c0_5, %c0_6] : memref<128x128xbf16, #tpu.memory_space<vmem>>, vector<128x128xbf16>
    tpu.vector_store %arg4[%c0_5, %c0_6], %7 {strides = array<i32>} : memref<128x128xbf16, #tpu.memory_space<vmem>>, vector<128x128xbf16>,
    return
  }
  func.func @transform_0(%arg0: i32) -> (i32, i32) {
    %c0_i32 = arith.constant 0 : i32
    %c0_i32_0 = arith.constant 0 : i32
    return %arg0, %c0_i32 : i32, i32
  }
  func.func @transform_1(%arg0: i32) -> (i32, i32) {
    %c0_i32 = arith.constant 0 : i32
    %c0_i32_0 = arith.constant 0 : i32
    %c0_i32_1 = arith.constant 0 : i32
    return %c0_i32, %c0_i32_0 : i32, i32
  }
  func.func @transform_2(%arg0: i32) -> (i32, i32) {
    %c0_i32 = arith.constant 0 : i32
    %c0_i32_0 = arith.constant 0 : i32
    return %arg0, %c0_i32 : i32, i32
  }
  func.func @transform_3(%arg0: i32) -> (i32, i32) {
    %c0_i32 = arith.constant 0 : i32
    %c0_i32_0 = arith.constant 0 : i32
    return %arg0, %c0_i32 : i32, i32
  }
}

module attributes {stable_mosaic.version = 11 : i64} {
  func.func @_propagate_kernel(%arg0: i32, %arg1: i32, %arg2: memref<128x128xbf16, #tpu.memory_space<vmem>>, %arg3: memref<128x128xbf16, #tpu.memory_space<vmem>>, %arg4: memref<128x1xf32, #tpu.memory_space<vmem>>, %arg5: memref<1x128xf32, #tpu.memory_space<vmem>>, %arg6: memref<128x128xf32, #tpu.memory_space<vmem>>, %arg7: memref<128x128xf32, #tpu.memory_space<vmem>>) attributes {dimension_semantics = [#tpu.dimension_semantics<parallel>, #tpu.dimension_semantics<arbitrary>], iteration_bounds = array<i64: 1, 1>, scalar_prefetch = 0 : i64, scratch_operands = 1 : i64, tpu.core_type = #tpu.core_type<tc>, window_params = [{transform_indices = @transform_0, window_bounds = array<i64: 128, 128>}, {transform_indices = @transform_1, window_bounds = array<i64: 128, 128>}, {transform_indices = @transform_2, window_bounds = array<i64: 128, 1>}, {pipeline_mode = #tpu.pipeline_mode<synchronous>, transform_indices = @transform_3, window_bounds = array<i64: 1, 128>}, {transform_indices = @transform_4, window_bounds = array<i64: 128, 128>}]} {
    %c0_i32 = arith.constant 0 : i32
    %0 = arith.cmpi eq, %arg1, %c0_i32 : i32
    %1 = arith.extui %0 : i1 to i32
    %c0_i32_0 = arith.constant 0 : i32
    %2 = arith.cmpi ne, %1, %c0_i32_0 : i32
    scf.if %2 {
      %cst_10 = arith.constant 0.000000e+00 : f32
      %12 = vector.broadcast %cst_10 : f32 to vector<128x128xf32>
      %c0_11 = arith.constant 0 : index
      %c0_12 = arith.constant 0 : index
      %13 = vector.load %arg7[%c0_11, %c0_12] : memref<128x128xf32, #tpu.memory_space<vmem>>, vector<128x128xf32>
      tpu.vector_store %arg7[%c0_11, %c0_12], %12 {strides = array<i32>} : memref<128x128xf32, #tpu.memory_space<vmem>>, vector<128x128xf32>,
    } else {
    }
    %c0 = arith.constant 0 : index
    %c0_1 = arith.constant 0 : index
    %3 = vector.load %arg7[%c0, %c0_1] : memref<128x128xf32, #tpu.memory_space<vmem>>, vector<128x128xf32>
    %c0_2 = arith.constant 0 : index
    %c0_3 = arith.constant 0 : index
    %4 = vector.load %arg2[%c0_2, %c0_3] : memref<128x128xbf16, #tpu.memory_space<vmem>>, vector<128x128xbf16>
    %c0_4 = arith.constant 0 : index
    %c0_5 = arith.constant 0 : index
    %5 = vector.load %arg3[%c0_4, %c0_5] : memref<128x128xbf16, #tpu.memory_space<vmem>>, vector<128x128xbf16>
    %cst = arith.constant dense<0.000000e+00> : vector<128x128xf32>
    %6 = tpu.matmul %4, %5, %cst {dimension_numbers = #tpu.dot_dimension_numbers<[1], [0], [0], [1], [0, 0, 1, 1], [], []>} : vector<128x128xbf16>, vector<128x128xbf16>, vector<128x128xf32> -> vector<128x128xf32>
    %7 = arith.addf %3, %6 : vector<128x128xf32>
    %c0_6 = arith.constant 0 : index
    %c0_7 = arith.constant 0 : index
    %8 = vector.load %arg7[%c0_6, %c0_7] : memref<128x128xf32, #tpu.memory_space<vmem>>, vector<128x128xf32>
    tpu.vector_store %arg7[%c0_6, %c0_7], %7 {strides = array<i32>} : memref<128x128xf32, #tpu.memory_space<vmem>>, vector<128x128xf32>,
    %c0_i32_8 = arith.constant 0 : i32
    %9 = arith.cmpi eq, %arg1, %c0_i32_8 : i32
    %10 = arith.extui %9 : i1 to i32
    %c0_i32_9 = arith.constant 0 : i32
    %11 = arith.cmpi ne, %10, %c0_i32_9 : i32
    scf.if %11 {
      %c0_10 = arith.constant 0 : index
      %c0_11 = arith.constant 0 : index
      %12 = vector.load %arg4[%c0_10, %c0_11] : memref<128x1xf32, #tpu.memory_space<vmem>>, vector<128x1xf32>
      %c0_12 = arith.constant 0 : index
      %c0_13 = arith.constant 0 : index
      %13 = vector.load %arg7[%c0_12, %c0_13] : memref<128x128xf32, #tpu.memory_space<vmem>>, vector<128x128xf32>
      %14 = vector.broadcast %12 : vector<128x1xf32> to vector<128x128xf32>
      %15 = arith.mulf %14, %13 : vector<128x128xf32>
      %c0_14 = arith.constant 0 : index
      %c0_15 = arith.constant 0 : index
      %16 = vector.load %arg5[%c0_14, %c0_15] : memref<1x128xf32, #tpu.memory_space<vmem>>, vector<1x128xf32>
      %17 = vector.broadcast %16 : vector<1x128xf32> to vector<128x128xf32>
      %18 = arith.addf %15, %17 : vector<128x128xf32>
      %cst_16 = arith.constant 0.000000e+00 : f32
      %19 = vector.broadcast %cst_16 : f32 to vector<128x128xf32>
      %20 = arith.maximumf %18, %19 : vector<128x128xf32>
      %c0_17 = arith.constant 0 : index
      %c0_18 = arith.constant 0 : index
      %21 = vector.load %arg6[%c0_17, %c0_18] : memref<128x128xf32, #tpu.memory_space<vmem>>, vector<128x128xf32>
      tpu.vector_store %arg6[%c0_17, %c0_18], %20 {strides = array<i32>} : memref<128x128xf32, #tpu.memory_space<vmem>>, vector<128x128xf32>,
    } else {
    }
    return
  }
  func.func @transform_0(%arg0: i32, %arg1: i32) -> (i32, i32) {
    %c0_i32 = arith.constant 0 : i32
    return %arg0, %arg1 : i32, i32
  }
  func.func @transform_1(%arg0: i32, %arg1: i32) -> (i32, i32) {
    %c0_i32 = arith.constant 0 : i32
    %c0_i32_0 = arith.constant 0 : i32
    return %arg1, %c0_i32 : i32, i32
  }
  func.func @transform_2(%arg0: i32, %arg1: i32) -> (i32, i32) {
    %c0_i32 = arith.constant 0 : i32
    %c0_i32_0 = arith.constant 0 : i32
    return %arg0, %c0_i32 : i32, i32
  }
  func.func @transform_3(%arg0: i32, %arg1: i32) -> (i32, i32) {
    %c0_i32 = arith.constant 0 : i32
    %c0_i32_0 = arith.constant 0 : i32
    %c0_i32_1 = arith.constant 0 : i32
    return %c0_i32, %c0_i32_0 : i32, i32
  }
  func.func @transform_4(%arg0: i32, %arg1: i32) -> (i32, i32) {
    %c0_i32 = arith.constant 0 : i32
    %c0_i32_0 = arith.constant 0 : i32
    return %arg0, %c0_i32 : i32, i32
  }
}

module attributes {stable_mosaic.version = 11 : i64} {
  func.func @_propagate_kernel(%arg0: i32, %arg1: i32, %arg2: memref<128x128xbf16, #tpu.memory_space<vmem>>, %arg3: memref<128x128xbf16, #tpu.memory_space<vmem>>, %arg4: memref<128x1xf32, #tpu.memory_space<vmem>>, %arg5: memref<1x128xf32, #tpu.memory_space<vmem>>, %arg6: memref<128x128xf32, #tpu.memory_space<vmem>>, %arg7: memref<128x128xf32, #tpu.memory_space<vmem>>) attributes {dimension_semantics = [#tpu.dimension_semantics<parallel>, #tpu.dimension_semantics<arbitrary>], iteration_bounds = array<i64: 1, 1>, scalar_prefetch = 0 : i64, scratch_operands = 1 : i64, tpu.core_type = #tpu.core_type<tc>, window_params = [{transform_indices = @transform_0, window_bounds = array<i64: 128, 128>}, {transform_indices = @transform_1, window_bounds = array<i64: 128, 128>}, {transform_indices = @transform_2, window_bounds = array<i64: 128, 1>}, {pipeline_mode = #tpu.pipeline_mode<synchronous>, transform_indices = @transform_3, window_bounds = array<i64: 1, 128>}, {transform_indices = @transform_4, window_bounds = array<i64: 128, 128>}]} {
    %c0_i32 = arith.constant 0 : i32
    %0 = arith.cmpi eq, %arg1, %c0_i32 : i32
    %1 = arith.extui %0 : i1 to i32
    %c0_i32_0 = arith.constant 0 : i32
    %2 = arith.cmpi ne, %1, %c0_i32_0 : i32
    scf.if %2 {
      %cst_10 = arith.constant 0.000000e+00 : f32
      %12 = vector.broadcast %cst_10 : f32 to vector<128x128xf32>
      %c0_11 = arith.constant 0 : index
      %c0_12 = arith.constant 0 : index
      %13 = vector.load %arg7[%c0_11, %c0_12] : memref<128x128xf32, #tpu.memory_space<vmem>>, vector<128x128xf32>
      tpu.vector_store %arg7[%c0_11, %c0_12], %12 {strides = array<i32>} : memref<128x128xf32, #tpu.memory_space<vmem>>, vector<128x128xf32>,
    } else {
    }
    %c0 = arith.constant 0 : index
    %c0_1 = arith.constant 0 : index
    %3 = vector.load %arg7[%c0, %c0_1] : memref<128x128xf32, #tpu.memory_space<vmem>>, vector<128x128xf32>
    %c0_2 = arith.constant 0 : index
    %c0_3 = arith.constant 0 : index
    %4 = vector.load %arg2[%c0_2, %c0_3] : memref<128x128xbf16, #tpu.memory_space<vmem>>, vector<128x128xbf16>
    %c0_4 = arith.constant 0 : index
    %c0_5 = arith.constant 0 : index
    %5 = vector.load %arg3[%c0_4, %c0_5] : memref<128x128xbf16, #tpu.memory_space<vmem>>, vector<128x128xbf16>
    %cst = arith.constant dense<0.000000e+00> : vector<128x128xf32>
    %6 = tpu.matmul %4, %5, %cst {dimension_numbers = #tpu.dot_dimension_numbers<[1], [0], [0], [1], [0, 0, 1, 1], [], []>} : vector<128x128xbf16>, vector<128x128xbf16>, vector<128x128xf32> -> vector<128x128xf32>
    %7 = arith.addf %3, %6 : vector<128x128xf32>
    %c0_6 = arith.constant 0 : index
    %c0_7 = arith.constant 0 : index
    %8 = vector.load %arg7[%c0_6, %c0_7] : memref<128x128xf32, #tpu.memory_space<vmem>>, vector<128x128xf32>
    tpu.vector_store %arg7[%c0_6, %c0_7], %7 {strides = array<i32>} : memref<128x128xf32, #tpu.memory_space<vmem>>, vector<128x128xf32>,
    %c0_i32_8 = arith.constant 0 : i32
    %9 = arith.cmpi eq, %arg1, %c0_i32_8 : i32
    %10 = arith.extui %9 : i1 to i32
    %c0_i32_9 = arith.constant 0 : i32
    %11 = arith.cmpi ne, %10, %c0_i32_9 : i32
    scf.if %11 {
      %c0_10 = arith.constant 0 : index
      %c0_11 = arith.constant 0 : index
      %12 = vector.load %arg4[%c0_10, %c0_11] : memref<128x1xf32, #tpu.memory_space<vmem>>, vector<128x1xf32>
      %c0_12 = arith.constant 0 : index
      %c0_13 = arith.constant 0 : index
      %13 = vector.load %arg7[%c0_12, %c0_13] : memref<128x128xf32, #tpu.memory_space<vmem>>, vector<128x128xf32>
      %14 = vector.broadcast %12 : vector<128x1xf32> to vector<128x128xf32>
      %15 = arith.mulf %14, %13 : vector<128x128xf32>
      %c0_14 = arith.constant 0 : index
      %c0_15 = arith.constant 0 : index
      %16 = vector.load %arg5[%c0_14, %c0_15] : memref<1x128xf32, #tpu.memory_space<vmem>>, vector<1x128xf32>
      %17 = vector.broadcast %16 : vector<1x128xf32> to vector<128x128xf32>
      %18 = arith.addf %15, %17 : vector<128x128xf32>
      %c0_16 = arith.constant 0 : index
      %c0_17 = arith.constant 0 : index
      %19 = vector.load %arg6[%c0_16, %c0_17] : memref<128x128xf32, #tpu.memory_space<vmem>>, vector<128x128xf32>
      tpu.vector_store %arg6[%c0_16, %c0_17], %18 {strides = array<i32>} : memref<128x128xf32, #tpu.memory_space<vmem>>, vector<128x128xf32>,
    } else {
    }
    return
  }
  func.func @transform_0(%arg0: i32, %arg1: i32) -> (i32, i32) {
    %c0_i32 = arith.constant 0 : i32
    return %arg0, %arg1 : i32, i32
  }
  func.func @transform_1(%arg0: i32, %arg1: i32) -> (i32, i32) {
    %c0_i32 = arith.constant 0 : i32
    %c0_i32_0 = arith.constant 0 : i32
    return %arg1, %c0_i32 : i32, i32
  }
  func.func @transform_2(%arg0: i32, %arg1: i32) -> (i32, i32) {
    %c0_i32 = arith.constant 0 : i32
    %c0_i32_0 = arith.constant 0 : i32
    return %arg0, %c0_i32 : i32, i32
  }
  func.func @transform_3(%arg0: i32, %arg1: i32) -> (i32, i32) {
    %c0_i32 = arith.constant 0 : i32
    %c0_i32_0 = arith.constant 0 : i32
    %c0_i32_1 = arith.constant 0 : i32
    return %c0_i32, %c0_i32_0 : i32, i32
  }
  func.func @transform_4(%arg0: i32, %arg1: i32) -> (i32, i32) {
    %c0_i32 = arith.constant 0 : i32
    %c0_i32_0 = arith.constant 0 : i32
    return %arg0, %c0_i32 : i32, i32
  }
}

</mosaic_0001>

<llo_original>
// kernel: agl_mgae_forward.7
$region0: #{agl_mgae_forward.7}
  #allocation0 [shape = 'u32[]', space=smem, size = 0x4, offset = 0x4, fixed_abs, tag = 'smem constant byte address 0x4 - core index']
  #allocation1 [shape = 'u32[144,128]{1,0:T(1,128)}', space=vmem, size = 0x12000, scoped, tag = 'internal scratch']
  %s0 = inlined_call_operand.vmem [shape: f32[128,128], index: 0, kind: input, shape index: {}]
  %s1 = inlined_call_operand.vmem [shape: bf16[128,128], index: 1, kind: input, shape index: {}]
  %s2 = inlined_call_operand.vmem [shape: f32[1,128], index: 2, kind: input, shape index: {}]
  %s3 = inlined_call_operand.vmem [shape: f32[128,128], index: 3, kind: output, shape index: {0}]
  %s4 = inlined_call_operand.vmem [shape: f32[1,1,128], index: 4, kind: output, shape index: {1}]
  %5 = xla_tuple %s3, %s4
  %s6 = sld [smem:[#allocation0]]
  $region30: #{agl_mgae_forward.7} parent=0
    _
  %s8 = ssub.s32 1, %s6
  %s9 = scalar_select 0, %s8, %s6
  // Predicated region
  $region2: #{agl_mgae_forward.7} parent=0 // pred_check
    _
  $region3: #{agl_mgae_forward.7} parent=0 // pred_check_branch
    %11 = sbr.rel (0) target = $region5
  $region4: #{agl_mgae_forward.7} parent=0 // pred_region
    _
  $region5: #{agl_mgae_forward.7} parent=0 // pred_fallthru
    _
  // Predicated region
  $region6: #{agl_mgae_forward.7} parent=0 // pred_check
    _
  $region7: #{agl_mgae_forward.7} parent=0 // pred_check_branch
    %13 = sbr.rel (0) target = $region9
  $region8: #{agl_mgae_forward.7} parent=0 // pred_region
    _
  $region9: #{agl_mgae_forward.7} parent=0 // pred_fallthru
    _
  // Predicated region
  $region10: #{agl_mgae_forward.7} parent=0 // pred_check
    _
  $region11: #{agl_mgae_forward.7} parent=0 // pred_check_branch
    %15 = sbr.rel (0) target = $region13
  $region12: #{agl_mgae_forward.7} parent=0 // pred_region
    _
  $region13: #{agl_mgae_forward.7} parent=0 // pred_fallthru
    _
  %v17 = vld [vmem:[%s0] sm:$0xff]
  %v18 = vld [vmem:[%s0 + $0x8] sm:$0xff]
  %v19 = vld [vmem:[%s0 + $0x10] sm:$0xff]
  %v20 = vld [vmem:[%s0 + $0x18] sm:$0xff]
  %v21 = vld [vmem:[%s0 + $0x20] sm:$0xff]
  %v22 = vld [vmem:[%s0 + $0x28] sm:$0xff]
  %v23 = vld [vmem:[%s0 + $0x30] sm:$0xff]
  %v24 = vld [vmem:[%s0 + $0x38] sm:$0xff]
  %v25 = vld [vmem:[%s0 + $0x40] sm:$0xff]
  %v26 = vld [vmem:[%s0 + $0x48] sm:$0xff]
  %v27 = vld [vmem:[%s0 + $0x50] sm:$0xff]
  %v28 = vld [vmem:[%s0 + $0x58] sm:$0xff]
  %v29 = vld [vmem:[%s0 + $0x60] sm:$0xff]
  %v30 = vld [vmem:[%s0 + $0x68] sm:$0xff]
  %v31 = vld [vmem:[%s0 + $0x70] sm:$0xff]
  %v32 = vld [vmem:[%s0 + $0x78] sm:$0xff]
  %v33 = vpack.c.bf16 %v18, %v17
  %v34 = vpack.c.bf16 %v20, %v19
  %v35 = vpack.c.bf16 %v22, %v21
  %v36 = vpack.c.bf16 %v24, %v23
  %v37 = vpack.c.bf16 %v26, %v25
  %v38 = vpack.c.bf16 %v28, %v27
  %v39 = vpack.c.bf16 %v30, %v29
  %v40 = vpack.c.bf16 %v32, %v31
  %v41 = vld [vmem:[%s1] sm:$0xf]
  %v42 = vld [vmem:[%s1 + $0x4] sm:$0xf]
  %v43 = vld [vmem:[%s1 + $0x8] sm:$0xf]
  %v44 = vld [vmem:[%s1 + $0xc] sm:$0xf]
  %v45 = vld [vmem:[%s1 + $0x10] sm:$0xf]
  %v46 = vld [vmem:[%s1 + $0x14] sm:$0xf]
  %v47 = vld [vmem:[%s1 + $0x18] sm:$0xf]
  %v48 = vld [vmem:[%s1 + $0x1c] sm:$0xf]
  %v49 = vld [vmem:[%s1 + $0x20] sm:$0xf]
  %v50 = vld [vmem:[%s1 + $0x24] sm:$0xf]
  %v51 = vld [vmem:[%s1 + $0x28] sm:$0xf]
  %v52 = vld [vmem:[%s1 + $0x2c] sm:$0xf]
  %v53 = vld [vmem:[%s1 + $0x30] sm:$0xf]
  %v54 = vld [vmem:[%s1 + $0x34] sm:$0xf]
  %v55 = vld [vmem:[%s1 + $0x38] sm:$0xf]
  %v56 = vld [vmem:[%s1 + $0x3c] sm:$0xf]
  %v57 = vld [vmem:[%s2] sm:$0x1]
  %v59 = vlaneseq
  %v60 = vshrl.u32 %v59, 7
  %v61 = vsub.s32 0, %v60
  %v62 = vrot.slane %v57, %v61
  %v80 = vunpack.c.l.b16 %v41
  %v81 = vunpack.c.l.b16 %v42
  %v82 = vunpack.c.l.b16 %v43
  %v83 = vunpack.c.l.b16 %v44
  %v84 = vunpack.c.l.b16 %v45
  %v85 = vunpack.c.l.b16 %v46
  %v86 = vunpack.c.l.b16 %v47
  %v87 = vunpack.c.l.b16 %v48
  %v88 = vunpack.c.l.b16 %v49
  %v89 = vunpack.c.l.b16 %v50
  %v90 = vunpack.c.l.b16 %v51
  %v91 = vunpack.c.l.b16 %v52
  %v92 = vunpack.c.l.b16 %v53
  %v93 = vunpack.c.l.b16 %v54
  %v94 = vunpack.c.l.b16 %v55
  %v95 = vunpack.c.l.b16 %v56
  %v96 = vpack.c.b16 %v81, %v80
  %v97 = vpack.c.b16 %v83, %v82
  %v98 = vpack.c.b16 %v85, %v84
  %v99 = vpack.c.b16 %v87, %v86
  %v100 = vpack.c.b16 %v89, %v88
  %v101 = vpack.c.b16 %v91, %v90
  %v102 = vpack.c.b16 %v93, %v92
  %v103 = vpack.c.b16 %v95, %v94
  %112 = vmatprep.subr.bf16.mxu0 0
  %113 = vmatpush1.bf16.msra.mxu0 %v96
  %114 = vmatprep.subr.bf16.mxu0 0
  %115 = vmatpush1.bf16.msra.mxu0 %v97
  %116 = vmatprep.subr.bf16.mxu0 0
  %117 = vmatpush1.bf16.msra.mxu0 %v98
  %118 = vmatprep.subr.bf16.mxu0 0
  %119 = vmatpush1.bf16.msra.mxu0 %v99
  %120 = vmatprep.subr.bf16.mxu0 0
  %121 = vmatpush1.bf16.msra.mxu0 %v100
  %122 = vmatprep.subr.bf16.mxu0 0
  %123 = vmatpush1.bf16.msra.mxu0 %v101
  %124 = vmatprep.subr.bf16.mxu0 0
  %125 = vmatpush1.bf16.msra.mxu0 %v102
  %126 = vmatprep.subr.bf16.mxu0 0
  %127 = vmatpush1.bf16.msra.mxu0 %v103
  %128 = vmatprep.subr.bf16.mxu0 0
  %129 = vmatpush1.bf16.msra.mxu0 0
  %130 = vmatprep.subr.bf16.mxu0 0
  %131 = vmatpush1.bf16.msra.mxu0 0
  %132 = vmatprep.subr.bf16.mxu0 0
  %133 = vmatpush1.bf16.msra.mxu0 0
  %134 = vmatprep.subr.bf16.mxu0 0
  %135 = vmatpush1.bf16.msra.mxu0 0
  %136 = vmatprep.subr.bf16.mxu0 0
  %137 = vmatpush1.bf16.msra.mxu0 0
  %138 = vmatprep.subr.bf16.mxu0 0
  %139 = vmatpush1.bf16.msra.mxu0 0
  %140 = vmatprep.subr.bf16.mxu0 0
  %141 = vmatpush1.bf16.msra.mxu0 0
  %142 = vmatprep.subr.bf16.mxu0 0
  %143 = vmatpush1.bf16.msra.mxu0 0
  %144 = vmatprep.mubr.bf16.mxu0 0
  %145 = vmatmul.mubr.bf16.gmra.mrb[0].mxu0 %v33
  %v146 = vpop.f32.mrb[0].mxu0
  %v147 = vadd.f32 %v62, %v146
  %v148 = vpop.f32.mrb[0].mxu0
  %v149 = vpop.f32.mrb[0].mxu0
  %v150 = vadd.f32 %v62, %v149
  %v151 = vpop.f32.mrb[0].mxu0
  %152 = vmatprep.mubr.bf16.mxu0 0
  %153 = vmatmul.mubr.bf16.gmra.mrb[0].mxu0 %v34
  %v154 = vpop.f32.mrb[0].mxu0
  %v155 = vadd.f32 %v62, %v154
  %v156 = vpop.f32.mrb[0].mxu0
  %v157 = vpop.f32.mrb[0].mxu0
  %v158 = vadd.f32 %v62, %v157
  %v159 = vpop.f32.mrb[0].mxu0
  %160 = vmatprep.mubr.bf16.mxu0 0
  %161 = vmatmul.mubr.bf16.gmra.mrb[0].mxu0 %v35
  %v162 = vpop.f32.mrb[0].mxu0
  %v163 = vadd.f32 %v62, %v162
  %v164 = vpop.f32.mrb[0].mxu0
  %v165 = vpop.f32.mrb[0].mxu0
  %v166 = vadd.f32 %v62, %v165
  %v167 = vpop.f32.mrb[0].mxu0
  %168 = vmatprep.mubr.bf16.mxu0 0
  %169 = vmatmul.mubr.bf16.gmra.mrb[0].mxu0 %v36
  %v170 = vpop.f32.mrb[0].mxu0
  %v171 = vadd.f32 %v62, %v170
  %v172 = vpop.f32.mrb[0].mxu0
  %v173 = vpop.f32.mrb[0].mxu0
  %v174 = vadd.f32 %v62, %v173
  %v175 = vpop.f32.mrb[0].mxu0
  %176 = vmatprep.mubr.bf16.mxu0 0
  %177 = vmatmul.mubr.bf16.gmra.mrb[0].mxu0 %v37
  %v178 = vpop.f32.mrb[0].mxu0
  %v179 = vadd.f32 %v62, %v178
  %v180 = vpop.f32.mrb[0].mxu0
  %v181 = vpop.f32.mrb[0].mxu0
  %v182 = vadd.f32 %v62, %v181
  %v183 = vpop.f32.mrb[0].mxu0
  %184 = vmatprep.mubr.bf16.mxu0 0
  %185 = vmatmul.mubr.bf16.gmra.mrb[0].mxu0 %v38
  %v186 = vpop.f32.mrb[0].mxu0
  %v187 = vadd.f32 %v62, %v186
  %v188 = vpop.f32.mrb[0].mxu0
  %v189 = vpop.f32.mrb[0].mxu0
  %v190 = vadd.f32 %v62, %v189
  %v191 = vpop.f32.mrb[0].mxu0
  %192 = vmatprep.mubr.bf16.mxu0 0
  %193 = vmatmul.mubr.bf16.gmra.mrb[0].mxu0 %v39
  %v194 = vpop.f32.mrb[0].mxu0
  %v195 = vadd.f32 %v62, %v194
  %v196 = vpop.f32.mrb[0].mxu0
  %v197 = vpop.f32.mrb[0].mxu0
  %v198 = vadd.f32 %v62, %v197
  %v199 = vpop.f32.mrb[0].mxu0
  %200 = vmatprep.mubr.bf16.mxu0 0
  %201 = vmatmul.mubr.bf16.gmra.mrb[0].mxu0 %v40
  %v202 = vpop.f32.mrb[0].mxu0
  %v203 = vadd.f32 %v62, %v202
  %v204 = vpop.f32.mrb[0].mxu0
  %v205 = vpop.f32.mrb[0].mxu0
  %v206 = vadd.f32 %v62, %v205
  %v207 = vpop.f32.mrb[0].mxu0
  %208 = vdwg.mxu0
  %v209 = vxor.u32 %v147, 2147483648
  %v210 = vxor.u32 %v150, 2147483648
  %v211 = vxor.u32 %v155, 2147483648
  %v212 = vxor.u32 %v158, 2147483648
  %v213 = vxor.u32 %v163, 2147483648
  %v214 = vxor.u32 %v166, 2147483648
  %v215 = vxor.u32 %v171, 2147483648
  %v216 = vxor.u32 %v174, 2147483648
  %v217 = vxor.u32 %v179, 2147483648
  %v218 = vxor.u32 %v182, 2147483648
  %v219 = vxor.u32 %v187, 2147483648
  %v220 = vxor.u32 %v190, 2147483648
  %v221 = vxor.u32 %v195, 2147483648
  %v222 = vxor.u32 %v198, 2147483648
  %v223 = vxor.u32 %v203, 2147483648
  %v224 = vxor.u32 %v206, 2147483648
  %v225 = vmul.f32 %v209, 1.442695
  %v226 = vpow.pop %v225
  %v227 = vmul.f32 %v210, 1.442695
  %v228 = vpow.pop %v227
  %v229 = vmul.f32 %v211, 1.442695
  %v230 = vpow.pop %v229
  %v231 = vmul.f32 %v212, 1.442695
  %v232 = vpow.pop %v231
  %v233 = vmul.f32 %v213, 1.442695
  %v234 = vpow.pop %v233
  %v235 = vmul.f32 %v214, 1.442695
  %v236 = vpow.pop %v235
  %v237 = vmul.f32 %v215, 1.442695
  %v238 = vpow.pop %v237
  %v239 = vmul.f32 %v216, 1.442695
  %v240 = vpow.pop %v239
  %v241 = vmul.f32 %v217, 1.442695
  %v242 = vpow.pop %v241
  %v243 = vmul.f32 %v218, 1.442695
  %v244 = vpow.pop %v243
  %v245 = vmul.f32 %v219, 1.442695
  %v246 = vpow.pop %v245
  %v247 = vmul.f32 %v220, 1.442695
  %v248 = vpow.pop %v247
  %v249 = vmul.f32 %v221, 1.442695
  %v250 = vpow.pop %v249
  %v251 = vmul.f32 %v222, 1.442695
  %v252 = vpow.pop %v251
  %v253 = vmul.f32 %v223, 1.442695
  %v254 = vpow.pop %v253
  %v255 = vmul.f32 %v224, 1.442695
  %v256 = vpow.pop %v255
  %v257 = vadd.f32 %v226, 1.0
  %v258 = vadd.f32 %v228, 1.0
  %v259 = vadd.f32 %v230, 1.0
  %v260 = vadd.f32 %v232, 1.0
  %v261 = vadd.f32 %v234, 1.0
  %v262 = vadd.f32 %v236, 1.0
  %v263 = vadd.f32 %v238, 1.0
  %v264 = vadd.f32 %v240, 1.0
  %v265 = vadd.f32 %v242, 1.0
  %v266 = vadd.f32 %v244, 1.0
  %v267 = vadd.f32 %v246, 1.0
  %v268 = vadd.f32 %v248, 1.0
  %v269 = vadd.f32 %v250, 1.0
  %v270 = vadd.f32 %v252, 1.0
  %v271 = vadd.f32 %v254, 1.0
  %v272 = vadd.f32 %v256, 1.0
  %v273 = vrcp.pop %v257
  %v274 = vmul.f32 1.0, %v273
  %v275 = vrcp.pop %v258
  %v276 = vmul.f32 1.0, %v275
  %v277 = vrcp.pop %v259
  %v278 = vmul.f32 1.0, %v277
  %v279 = vrcp.pop %v260
  %v280 = vmul.f32 1.0, %v279
  %v281 = vrcp.pop %v261
  %v282 = vmul.f32 1.0, %v281
  %v283 = vrcp.pop %v262
  %v284 = vmul.f32 1.0, %v283
  %v285 = vrcp.pop %v263
  %v286 = vmul.f32 1.0, %v285
  %v287 = vrcp.pop %v264
  %v288 = vmul.f32 1.0, %v287
  %v289 = vrcp.pop %v265
  %v290 = vmul.f32 1.0, %v289
  %v291 = vrcp.pop %v266
  %v292 = vmul.f32 1.0, %v291
  %v293 = vrcp.pop %v267
  %v294 = vmul.f32 1.0, %v293
  %v295 = vrcp.pop %v268
  %v296 = vmul.f32 1.0, %v295
  %v297 = vrcp.pop %v269
  %v298 = vmul.f32 1.0, %v297
  %v299 = vrcp.pop %v270
  %v300 = vmul.f32 1.0, %v299
  %v301 = vrcp.pop %v271
  %v302 = vmul.f32 1.0, %v301
  %v303 = vrcp.pop %v272
  %v304 = vmul.f32 1.0, %v303
  %v305 = vmul.f32 %v17, %v274
  %v306 = vmul.f32 %v18, %v276
  %v307 = vmul.f32 %v19, %v278
  %v308 = vmul.f32 %v20, %v280
  %v309 = vmul.f32 %v21, %v282
  %v310 = vmul.f32 %v22, %v284
  %v311 = vmul.f32 %v23, %v286
  %v312 = vmul.f32 %v24, %v288
  %v313 = vmul.f32 %v25, %v290
  %v314 = vmul.f32 %v26, %v292
  %v315 = vmul.f32 %v27, %v294
  %v316 = vmul.f32 %v28, %v296
  %v317 = vmul.f32 %v29, %v298
  %v318 = vmul.f32 %v30, %v300
  %v319 = vmul.f32 %v31, %v302
  %v320 = vmul.f32 %v32, %v304
  %321 = vst [vmem:[%s3] sm:$0xff] %v305
  %322 = vst [vmem:[%s3 + $0x8] sm:$0xff] %v306
  %323 = vst [vmem:[%s3 + $0x10] sm:$0xff] %v307
  %324 = vst [vmem:[%s3 + $0x18] sm:$0xff] %v308
  %325 = vst [vmem:[%s3 + $0x20] sm:$0xff] %v309
  %326 = vst [vmem:[%s3 + $0x28] sm:$0xff] %v310
  %327 = vst [vmem:[%s3 + $0x30] sm:$0xff] %v311
  %328 = vst [vmem:[%s3 + $0x38] sm:$0xff] %v312
  %329 = vst [vmem:[%s3 + $0x40] sm:$0xff] %v313
  %330 = vst [vmem:[%s3 + $0x48] sm:$0xff] %v314
  %331 = vst [vmem:[%s3 + $0x50] sm:$0xff] %v315
  %332 = vst [vmem:[%s3 + $0x58] sm:$0xff] %v316
  %333 = vst [vmem:[%s3 + $0x60] sm:$0xff] %v317
  %334 = vst [vmem:[%s3 + $0x68] sm:$0xff] %v318
  %335 = vst [vmem:[%s3 + $0x70] sm:$0xff] %v319
  %336 = vst [vmem:[%s3 + $0x78] sm:$0xff] %v320
  %v337 = vmul.f32 %v305, %v305
  %v338 = vmul.f32 %v306, %v306
  %v339 = vmul.f32 %v307, %v307
  %v340 = vmul.f32 %v308, %v308
  %v341 = vmul.f32 %v309, %v309
  %v342 = vmul.f32 %v310, %v310
  %v343 = vmul.f32 %v311, %v311
  %v344 = vmul.f32 %v312, %v312
  %v345 = vmul.f32 %v313, %v313
  %v346 = vmul.f32 %v314, %v314
  %v347 = vmul.f32 %v315, %v315
  %v348 = vmul.f32 %v316, %v316
  %v349 = vmul.f32 %v317, %v317
  %v350 = vmul.f32 %v318, %v318
  %v351 = vmul.f32 %v319, %v319
  %v352 = vmul.f32 %v320, %v320
  %v353 = vadd.f32 %v337, %v338
  %v354 = vadd.f32 %v353, %v339
  %v355 = vadd.f32 %v354, %v340
  %v356 = vadd.f32 %v355, %v341
  %v357 = vadd.f32 %v356, %v342
  %v358 = vadd.f32 %v357, %v343
  %v359 = vadd.f32 %v358, %v344
  %v360 = vadd.f32 %v359, %v345
  %v361 = vadd.f32 %v360, %v346
  %v362 = vadd.f32 %v361, %v347
  %v363 = vadd.f32 %v362, %v348
  %v364 = vadd.f32 %v363, %v349
  %v365 = vadd.f32 %v364, %v350
  %v366 = vadd.f32 %v365, %v351
  %v367 = vadd.f32 %v366, %v352
  %v368 = vrot.slane %v367, 4
  %v369 = vadd.f32 %v367, %v368
  %v370 = vrot.slane %v369, 2
  %v371 = vadd.f32 %v369, %v370
  %v372 = vrot.slane %v371, 1
  %v373 = vadd.f32 %v371, %v372
  %374 = vst [vmem:[%s4] sm:$0x1] %v373
  // Predicated region
  $region14: #{agl_mgae_forward.7} parent=0 // pred_check
    _
  $region15: #{agl_mgae_forward.7} parent=0 // pred_check_branch
    %376 = sbr.rel (0) target = $region17
  $region16: #{agl_mgae_forward.7} parent=0 // pred_region
    _
  $region17: #{agl_mgae_forward.7} parent=0 // pred_fallthru
    _
  // Predicated region
  $region18: #{agl_mgae_forward.7} parent=0 // pred_check
    _
  $region19: #{agl_mgae_forward.7} parent=0 // pred_check_branch
    %378 = sbr.rel (0) target = $region21
  $region20: #{agl_mgae_forward.7} parent=0 // pred_region
    _
  $region21: #{agl_mgae_forward.7} parent=0 // pred_fallthru
    _
  // Predicated region
  $region22: #{agl_mgae_forward.7} parent=0 // pred_check
    _
  $region23: #{agl_mgae_forward.7} parent=0 // pred_check_branch
    %380 = sbr.rel (0) target = $region25
  $region24: #{agl_mgae_forward.7} parent=0 // pred_region
    _
  $region25: #{agl_mgae_forward.7} parent=0 // pred_fallthru
    _
  // Predicated region
  $region26: #{agl_mgae_forward.7} parent=0 // pred_check
    _
  $region27: #{agl_mgae_forward.7} parent=0 // pred_check_branch
    %382 = sbr.rel (0) target = $region29
  $region28: #{agl_mgae_forward.7} parent=0 // pred_region
    _
  $region29: #{agl_mgae_forward.7} parent=0 // pred_fallthru
    _

// kernel: agl_mgae_forward.8
$region0: #{agl_mgae_forward.8}
  #allocation0 [shape = 'u32[]', space=smem, size = 0x4, offset = 0x4, fixed_abs, tag = 'smem constant byte address 0x4 - core index']
  #allocation1 [shape = 'u32[144,128]{1,0:T(1,128)}', space=vmem, size = 0x12000, scoped, tag = 'internal scratch']
  %s0 = inlined_call_operand.vmem [shape: f32[128,128], index: 0, kind: input, shape index: {}, may-alias: {0,1}]
  %s1 = inlined_call_operand.vmem [shape: f32[128,128], index: 1, kind: input, shape index: {}, may-alias: {0,1}]
  %s2 = inlined_call_operand.vmem [shape: f32[1,128], index: 2, kind: input, shape index: {}]
  %s3 = inlined_call_operand.vmem [shape: f32[128,128], index: 3, kind: output, shape index: {0}]
  %s4 = inlined_call_operand.vmem [shape: f32[128,128], index: 4, kind: output, shape index: {1}]
  %5 = xla_tuple %s3, %s4
  %s6 = sld [smem:[#allocation0]]
  $region34: #{agl_mgae_forward.8} parent=0
    _
  %s8 = ssub.s32 1, %s6
  %s9 = scalar_select 0, %s8, %s6
  // Predicated region
  $region2: #{agl_mgae_forward.8} parent=0 // pred_check
    _
  $region3: #{agl_mgae_forward.8} parent=0 // pred_check_branch
    %11 = sbr.rel (0) target = $region5
  $region4: #{agl_mgae_forward.8} parent=0 // pred_region
    _
  $region5: #{agl_mgae_forward.8} parent=0 // pred_fallthru
    _
  // Predicated region
  $region6: #{agl_mgae_forward.8} parent=0 // pred_check
    _
  $region7: #{agl_mgae_forward.8} parent=0 // pred_check_branch
    %13 = sbr.rel (0) target = $region9
  $region8: #{agl_mgae_forward.8} parent=0 // pred_region
    _
  $region9: #{agl_mgae_forward.8} parent=0 // pred_fallthru
    _
  // Predicated region
  $region10: #{agl_mgae_forward.8} parent=0 // pred_check
    _
  $region11: #{agl_mgae_forward.8} parent=0 // pred_check_branch
    %15 = sbr.rel (0) target = $region13
  $region12: #{agl_mgae_forward.8} parent=0 // pred_region
    _
  $region13: #{agl_mgae_forward.8} parent=0 // pred_fallthru
    _
  %v17 = vld [vmem:[%s2] sm:$0x1]
  %v18 = vrsqrt.pop %v17
  %v19 = vmul.f32 %v17, %v18
  %vm20 = vcmp.eq.f32.partialorder %v17, inf
  %v21 = vsel %vm20, %v17, %v19
  %vm22 = vcmp.eq.f32.partialorder %v17, 0.0
  %v23 = vand.u32 %v17, 2147483648
  %v24 = vsel %vm22, %v23, %v21
  %v25 = vmax.f32 %v24, 1e-12
  %v26 = vrcp.pop %v25
  %v27 = vmul.f32 1.0, %v26
  %v28 = vld [vmem:[%s0] sm:$0xff]
  %v29 = vld [vmem:[%s0 + $0x8] sm:$0xff]
  %v30 = vld [vmem:[%s0 + $0x10] sm:$0xff]
  %v31 = vld [vmem:[%s0 + $0x18] sm:$0xff]
  %v32 = vld [vmem:[%s0 + $0x20] sm:$0xff]
  %v33 = vld [vmem:[%s0 + $0x28] sm:$0xff]
  %v34 = vld [vmem:[%s0 + $0x30] sm:$0xff]
  %v35 = vld [vmem:[%s0 + $0x38] sm:$0xff]
  %v36 = vld [vmem:[%s0 + $0x40] sm:$0xff]
  %v37 = vld [vmem:[%s0 + $0x48] sm:$0xff]
  %v38 = vld [vmem:[%s0 + $0x50] sm:$0xff]
  %v39 = vld [vmem:[%s0 + $0x58] sm:$0xff]
  %v40 = vld [vmem:[%s0 + $0x60] sm:$0xff]
  %v41 = vld [vmem:[%s0 + $0x68] sm:$0xff]
  %v42 = vld [vmem:[%s0 + $0x70] sm:$0xff]
  %v43 = vld [vmem:[%s0 + $0x78] sm:$0xff]
  %v45 = vlaneseq
  %v46 = vshrl.u32 %v45, 7
  %v47 = vsub.s32 0, %v46
  %v48 = vrot.slane %v27, %v47
  %v50 = vmul.f32 %v28, %v48
  %v51 = vmul.f32 %v29, %v48
  %v52 = vmul.f32 %v30, %v48
  %v53 = vmul.f32 %v31, %v48
  %v54 = vmul.f32 %v32, %v48
  %v55 = vmul.f32 %v33, %v48
  %v56 = vmul.f32 %v34, %v48
  %v57 = vmul.f32 %v35, %v48
  %v58 = vmul.f32 %v36, %v48
  %v59 = vmul.f32 %v37, %v48
  %v60 = vmul.f32 %v38, %v48
  %v61 = vmul.f32 %v39, %v48
  %v62 = vmul.f32 %v40, %v48
  %v63 = vmul.f32 %v41, %v48
  %v64 = vmul.f32 %v42, %v48
  %v65 = vmul.f32 %v43, %v48
  %v66 = vld [vmem:[%s1] sm:$0xff]
  %v67 = vld [vmem:[%s1 + $0x8] sm:$0xff]
  %v68 = vld [vmem:[%s1 + $0x10] sm:$0xff]
  %v69 = vld [vmem:[%s1 + $0x18] sm:$0xff]
  %v70 = vld [vmem:[%s1 + $0x20] sm:$0xff]
  %v71 = vld [vmem:[%s1 + $0x28] sm:$0xff]
  %v72 = vld [vmem:[%s1 + $0x30] sm:$0xff]
  %v73 = vld [vmem:[%s1 + $0x38] sm:$0xff]
  %v74 = vld [vmem:[%s1 + $0x40] sm:$0xff]
  %v75 = vld [vmem:[%s1 + $0x48] sm:$0xff]
  %v76 = vld [vmem:[%s1 + $0x50] sm:$0xff]
  %v77 = vld [vmem:[%s1 + $0x58] sm:$0xff]
  %v78 = vld [vmem:[%s1 + $0x60] sm:$0xff]
  %v79 = vld [vmem:[%s1 + $0x68] sm:$0xff]
  %v80 = vld [vmem:[%s1 + $0x70] sm:$0xff]
  %v81 = vld [vmem:[%s1 + $0x78] sm:$0xff]
  %v82 = vmul.f32 %v66, %v48
  %v83 = vmul.f32 %v67, %v48
  %v84 = vmul.f32 %v68, %v48
  %v85 = vmul.f32 %v69, %v48
  %v86 = vmul.f32 %v70, %v48
  %v87 = vmul.f32 %v71, %v48
  %v88 = vmul.f32 %v72, %v48
  %v89 = vmul.f32 %v73, %v48
  %v90 = vmul.f32 %v74, %v48
  %v91 = vmul.f32 %v75, %v48
  %v92 = vmul.f32 %v76, %v48
  %v93 = vmul.f32 %v77, %v48
  %v94 = vmul.f32 %v78, %v48
  %v95 = vmul.f32 %v79, %v48
  %v96 = vmul.f32 %v80, %v48
  %v97 = vmul.f32 %v81, %v48
  %v98 = vpack.c.bf16 %v51, %v50
  %v99 = vpack.c.bf16 %v53, %v52
  %v100 = vpack.c.bf16 %v55, %v54
  %v101 = vpack.c.bf16 %v57, %v56
  %v102 = vpack.c.bf16 %v59, %v58
  %v103 = vpack.c.bf16 %v61, %v60
  %v104 = vpack.c.bf16 %v63, %v62
  %v105 = vpack.c.bf16 %v65, %v64
  %v106 = vpack.c.bf16 %v83, %v82
  %v107 = vpack.c.bf16 %v85, %v84
  %v108 = vpack.c.bf16 %v87, %v86
  %v109 = vpack.c.bf16 %v89, %v88
  %v110 = vpack.c.bf16 %v91, %v90
  %v111 = vpack.c.bf16 %v93, %v92
  %v112 = vpack.c.bf16 %v95, %v94
  %v113 = vpack.c.bf16 %v97, %v96
  %114 = vmatprep.subr.bf16.mxu0 0
  %115 = vmatpush1.bf16.xpose.msra.mxu0 %v106
  %116 = vmatprep.subr.bf16.mxu0 0
  %117 = vmatpush1.bf16.xpose.msra.mxu0 %v107
  %118 = vmatprep.subr.bf16.mxu0 0
  %119 = vmatpush1.bf16.xpose.msra.mxu0 %v108
  %120 = vmatprep.subr.bf16.mxu0 0
  %121 = vmatpush1.bf16.xpose.msra.mxu0 %v109
  %122 = vmatprep.subr.bf16.mxu0 0
  %123 = vmatpush1.bf16.xpose.msra.mxu0 %v110
  %124 = vmatprep.subr.bf16.mxu0 0
  %125 = vmatpush1.bf16.xpose.msra.mxu0 %v111
  %126 = vmatprep.subr.bf16.mxu0 0
  %127 = vmatpush1.bf16.xpose.msra.mxu0 %v112
  %128 = vmatprep.subr.bf16.mxu0 0
  %129 = vmatpush1.bf16.xpose.msra.mxu0 %v113
  %130 = vmatprep.subr.bf16.mxu0 0
  %131 = vmatpush1.bf16.xpose.msra.mxu0 0
  %132 = vmatprep.subr.bf16.mxu0 0
  %133 = vmatpush1.bf16.xpose.msra.mxu0 0
  %134 = vmatprep.subr.bf16.mxu0 0
  %135 = vmatpush1.bf16.xpose.msra.mxu0 0
  %136 = vmatprep.subr.bf16.mxu0 0
  %137 = vmatpush1.bf16.xpose.msra.mxu0 0
  %138 = vmatprep.subr.bf16.mxu0 0
  %139 = vmatpush1.bf16.xpose.msra.mxu0 0
  %140 = vmatprep.subr.bf16.mxu0 0
  %141 = vmatpush1.bf16.xpose.msra.mxu0 0
  %142 = vmatprep.subr.bf16.mxu0 0
  %143 = vmatpush1.bf16.xpose.msra.mxu0 0
  %144 = vmatprep.subr.bf16.mxu0 0
  %145 = vmatpush1.bf16.xpose.msra.mxu0 0
  %146 = vmatprep.mubr.bf16.mxu0 0
  %147 = vmatmul.mubr.bf16.gmra.mrb[0].mxu0 %v98
  %v148 = vpop.f32.mrb[0].mxu0
  %v149 = vadd.f32 0.0, %v148
  %v150 = vpop.f32.mrb[0].mxu0
  %v151 = vpop.f32.mrb[0].mxu0
  %v152 = vadd.f32 0.0, %v151
  %v153 = vpop.f32.mrb[0].mxu0
  %154 = vmatprep.mubr.bf16.mxu0 0
  %155 = vmatmul.mubr.bf16.gmra.mrb[0].mxu0 %v99
  %v156 = vpop.f32.mrb[0].mxu0
  %v157 = vadd.f32 0.0, %v156
  %v158 = vpop.f32.mrb[0].mxu0
  %v159 = vpop.f32.mrb[0].mxu0
  %v160 = vadd.f32 0.0, %v159
  %v161 = vpop.f32.mrb[0].mxu0
  %162 = vmatprep.mubr.bf16.mxu0 0
  %163 = vmatmul.mubr.bf16.gmra.mrb[0].mxu0 %v100
  %v164 = vpop.f32.mrb[0].mxu0
  %v165 = vadd.f32 0.0, %v164
  %v166 = vpop.f32.mrb[0].mxu0
  %v167 = vpop.f32.mrb[0].mxu0
  %v168 = vadd.f32 0.0, %v167
  %v169 = vpop.f32.mrb[0].mxu0
  %170 = vmatprep.mubr.bf16.mxu0 0
  %171 = vmatmul.mubr.bf16.gmra.mrb[0].mxu0 %v101
  %v172 = vpop.f32.mrb[0].mxu0
  %v173 = vadd.f32 0.0, %v172
  %v174 = vpop.f32.mrb[0].mxu0
  %v175 = vpop.f32.mrb[0].mxu0
  %v176 = vadd.f32 0.0, %v175
  %v177 = vpop.f32.mrb[0].mxu0
  %178 = vmatprep.mubr.bf16.mxu0 0
  %179 = vmatmul.mubr.bf16.gmra.mrb[0].mxu0 %v102
  %v180 = vpop.f32.mrb[0].mxu0
  %v181 = vadd.f32 0.0, %v180
  %v182 = vpop.f32.mrb[0].mxu0
  %v183 = vpop.f32.mrb[0].mxu0
  %v184 = vadd.f32 0.0, %v183
  %v185 = vpop.f32.mrb[0].mxu0
  %186 = vmatprep.mubr.bf16.mxu0 0
  %187 = vmatmul.mubr.bf16.gmra.mrb[0].mxu0 %v103
  %v188 = vpop.f32.mrb[0].mxu0
  %v189 = vadd.f32 0.0, %v188
  %v190 = vpop.f32.mrb[0].mxu0
  %v191 = vpop.f32.mrb[0].mxu0
  %v192 = vadd.f32 0.0, %v191
  %v193 = vpop.f32.mrb[0].mxu0
  %194 = vmatprep.mubr.bf16.mxu0 0
  %195 = vmatmul.mubr.bf16.gmra.mrb[0].mxu0 %v104
  %v196 = vpop.f32.mrb[0].mxu0
  %v197 = vadd.f32 0.0, %v196
  %v198 = vpop.f32.mrb[0].mxu0
  %v199 = vpop.f32.mrb[0].mxu0
  %v200 = vadd.f32 0.0, %v199
  %v201 = vpop.f32.mrb[0].mxu0
  %202 = vmatprep.mubr.bf16.mxu0 0
  %203 = vmatmul.mubr.bf16.gmra.mrb[0].mxu0 %v105
  %v204 = vpop.f32.mrb[0].mxu0
  %v205 = vadd.f32 0.0, %v204
  %v206 = vpop.f32.mrb[0].mxu0
  %v207 = vpop.f32.mrb[0].mxu0
  %v208 = vadd.f32 0.0, %v207
  %v209 = vpop.f32.mrb[0].mxu0
  %210 = vdwg.mxu0
  %s211 = smul.u32 0, 128
  %v212 = vlaneseq
  %v213 = vand.u32 %v212, 127
  %v214 = vstv %s211
  %v215 = vadd.s32 %v214, %v213
  %vm216 = vcmp.lt.s32.totalorder %v215, 128
  %v217 = vsel %vm216, %v149, -inf
  %v218 = vsel %vm216, %v152, -inf
  %v219 = vsel %vm216, %v157, -inf
  %v220 = vsel %vm216, %v160, -inf
  %v221 = vsel %vm216, %v165, -inf
  %v222 = vsel %vm216, %v168, -inf
  %v223 = vsel %vm216, %v173, -inf
  %v224 = vsel %vm216, %v176, -inf
  %v225 = vsel %vm216, %v181, -inf
  %v226 = vsel %vm216, %v184, -inf
  %v227 = vsel %vm216, %v189, -inf
  %v228 = vsel %vm216, %v192, -inf
  %v229 = vsel %vm216, %v197, -inf
  %v230 = vsel %vm216, %v200, -inf
  %v231 = vsel %vm216, %v205, -inf
  %v232 = vsel %vm216, %v208, -inf
  %233 = vst [vmem:[%s3] sm:$0xff] %v217
  %234 = vst [vmem:[%s3 + $0x8] sm:$0xff] %v218
  %235 = vst [vmem:[%s3 + $0x10] sm:$0xff] %v219
  %236 = vst [vmem:[%s3 + $0x18] sm:$0xff] %v220
  %237 = vst [vmem:[%s3 + $0x20] sm:$0xff] %v221
  %238 = vst [vmem:[%s3 + $0x28] sm:$0xff] %v222
  %239 = vst [vmem:[%s3 + $0x30] sm:$0xff] %v223
  %240 = vst [vmem:[%s3 + $0x38] sm:$0xff] %v224
  %241 = vst [vmem:[%s3 + $0x40] sm:$0xff] %v225
  %242 = vst [vmem:[%s3 + $0x48] sm:$0xff] %v226
  %243 = vst [vmem:[%s3 + $0x50] sm:$0xff] %v227
  %244 = vst [vmem:[%s3 + $0x58] sm:$0xff] %v228
  %245 = vst [vmem:[%s3 + $0x60] sm:$0xff] %v229
  %246 = vst [vmem:[%s3 + $0x68] sm:$0xff] %v230
  %247 = vst [vmem:[%s3 + $0x70] sm:$0xff] %v231
  %248 = vst [vmem:[%s3 + $0x78] sm:$0xff] %v232
  %p249 = scmp.eq.s32.totalorder 0, 0
  // Predicated region
  $region14: #{agl_mgae_forward.8} parent=0 // pred_check
    %p250 = pneg %p249
  $region15: #{agl_mgae_forward.8} parent=0 // pred_check_branch
    %252 = sbr.rel (%p250) target = $region17
  $region16: #{agl_mgae_forward.8} parent=0 // pred_region
    %253 = vst [vmem:[%s4] sm:$0xff] %v50
    %254 = vst [vmem:[%s4 + $0x8] sm:$0xff] %v51
    %255 = vst [vmem:[%s4 + $0x10] sm:$0xff] %v52
    %256 = vst [vmem:[%s4 + $0x18] sm:$0xff] %v53
    %257 = vst [vmem:[%s4 + $0x20] sm:$0xff] %v54
    %258 = vst [vmem:[%s4 + $0x28] sm:$0xff] %v55
    %259 = vst [vmem:[%s4 + $0x30] sm:$0xff] %v56
    %260 = vst [vmem:[%s4 + $0x38] sm:$0xff] %v57
    %261 = vst [vmem:[%s4 + $0x40] sm:$0xff] %v58
    %262 = vst [vmem:[%s4 + $0x48] sm:$0xff] %v59
    %263 = vst [vmem:[%s4 + $0x50] sm:$0xff] %v60
    %264 = vst [vmem:[%s4 + $0x58] sm:$0xff] %v61
    %265 = vst [vmem:[%s4 + $0x60] sm:$0xff] %v62
    %266 = vst [vmem:[%s4 + $0x68] sm:$0xff] %v63
    %267 = vst [vmem:[%s4 + $0x70] sm:$0xff] %v64
    %268 = vst [vmem:[%s4 + $0x78] sm:$0xff] %v65
  $region17: #{agl_mgae_forward.8} parent=0 // pred_fallthru
    _
  // Predicated region
  $region18: #{agl_mgae_forward.8} parent=0 // pred_check
    _
  $region19: #{agl_mgae_forward.8} parent=0 // pred_check_branch
    %270 = sbr.rel (0) target = $region21
  $region20: #{agl_mgae_forward.8} parent=0 // pred_region
    _
  $region21: #{agl_mgae_forward.8} parent=0 // pred_fallthru
    _
  // Predicated region
  $region22: #{agl_mgae_forward.8} parent=0 // pred_check
    _
  $region23: #{agl_mgae_forward.8} parent=0 // pred_check_branch
    %272 = sbr.rel (0) target = $region25
  $region24: #{agl_mgae_forward.8} parent=0 // pred_region
    _
  $region25: #{agl_mgae_forward.8} parent=0 // pred_fallthru
    _
  // Predicated region
  $region26: #{agl_mgae_forward.8} parent=0 // pred_check
    _
  $region27: #{agl_mgae_forward.8} parent=0 // pred_check_branch
    %274 = sbr.rel (0) target = $region29
  $region28: #{agl_mgae_forward.8} parent=0 // pred_region
    _
  $region29: #{agl_mgae_forward.8} parent=0 // pred_fallthru
    _
  // Predicated region
  $region30: #{agl_mgae_forward.8} parent=0 // pred_check
    _
  $region31: #{agl_mgae_forward.8} parent=0 // pred_check_branch
    %276 = sbr.rel (0) target = $region33
  $region32: #{agl_mgae_forward.8} parent=0 // pred_region
    _
  $region33: #{agl_mgae_forward.8} parent=0 // pred_fallthru
    _

// kernel: agl_mgae_forward.9
$region0: #{agl_mgae_forward.9}
  #allocation0 [shape = 'u32[]', space=smem, size = 0x4, offset = 0x4, fixed_abs, tag = 'smem constant byte address 0x4 - core index']
  #allocation1 [shape = 'u32[144,128]{1,0:T(1,128)}', space=vmem, size = 0x12000, scoped, tag = 'internal scratch']
  %s0 = inlined_call_operand.vmem [shape: f32[128,128], index: 0, kind: input, shape index: {}, may-alias: {0,1}]
  %s1 = inlined_call_operand.vmem [shape: f32[128,128], index: 1, kind: input, shape index: {}, may-alias: {0,1}]
  %s2 = inlined_call_operand.hbm [shape: f32[128,128], index: 2, kind: output, shape index: {0}]
  %s3 = inlined_call_operand.vmem [shape: bf16[128,128], index: 3, kind: output, shape index: {1}]
  %s4 = inlined_call_operand.vmem [shape: f32[128,1], index: 4, kind: output, shape index: {2}]
  %5 = xla_tuple %s2, %s3, %s4
  %s6 = sld [smem:[#allocation0]]
  $region38: #{agl_mgae_forward.9} parent=0
    _
  %s8 = ssub.s32 1, %s6
  %s9 = scalar_select 0, %s8, %s6
  $region1: #{agl_mgae_forward.9} parent=0
    #allocation2 [shape = 'u8[65536]{0}', space=vmem, size = 0x10000, scoped, tag = 'output window, operand 0, single buffered']
    #allocation3 [shape = 's32[1]{0}', space=sflag, size = 0x4, scoped, tag = 'scoped memory for agl_mgae_forward.9']
    %10 = vsyncpa [#allocation3], 0
    // Predicated region
    $region2: #{agl_mgae_forward.9} parent=1 // pred_check
      _
    $region3: #{agl_mgae_forward.9} parent=1 // pred_check_branch
      %12 = sbr.rel (0) target = $region5
    $region4: #{agl_mgae_forward.9} parent=1 // pred_region
      _
    $region5: #{agl_mgae_forward.9} parent=1 // pred_fallthru
      _
    // Predicated region
    $region6: #{agl_mgae_forward.9} parent=1 // pred_check
      _
    $region7: #{agl_mgae_forward.9} parent=1 // pred_check_branch
      %14 = sbr.rel (0) target = $region9
    $region8: #{agl_mgae_forward.9} parent=1 // pred_region
      _
    $region9: #{agl_mgae_forward.9} parent=1 // pred_fallthru
      _
    %v15 = vld [vmem:[%s0] sm:$0xff]
    %v16 = vld [vmem:[%s0 + $0x8] sm:$0xff]
    %v17 = vld [vmem:[%s0 + $0x10] sm:$0xff]
    %v18 = vld [vmem:[%s0 + $0x18] sm:$0xff]
    %v19 = vld [vmem:[%s0 + $0x20] sm:$0xff]
    %v20 = vld [vmem:[%s0 + $0x28] sm:$0xff]
    %v21 = vld [vmem:[%s0 + $0x30] sm:$0xff]
    %v22 = vld [vmem:[%s0 + $0x38] sm:$0xff]
    %v23 = vld [vmem:[%s0 + $0x40] sm:$0xff]
    %v24 = vld [vmem:[%s0 + $0x48] sm:$0xff]
    %v25 = vld [vmem:[%s0 + $0x50] sm:$0xff]
    %v26 = vld [vmem:[%s0 + $0x58] sm:$0xff]
    %v27 = vld [vmem:[%s0 + $0x60] sm:$0xff]
    %v28 = vld [vmem:[%s0 + $0x68] sm:$0xff]
    %v29 = vld [vmem:[%s0 + $0x70] sm:$0xff]
    %v30 = vld [vmem:[%s0 + $0x78] sm:$0xff]
    %v31 = vld [vmem:[%s1] sm:$0xff]
    %v32 = vld [vmem:[%s1 + $0x8] sm:$0xff]
    %v33 = vld [vmem:[%s1 + $0x10] sm:$0xff]
    %v34 = vld [vmem:[%s1 + $0x18] sm:$0xff]
    %v35 = vld [vmem:[%s1 + $0x20] sm:$0xff]
    %v36 = vld [vmem:[%s1 + $0x28] sm:$0xff]
    %v37 = vld [vmem:[%s1 + $0x30] sm:$0xff]
    %v38 = vld [vmem:[%s1 + $0x38] sm:$0xff]
    %v39 = vld [vmem:[%s1 + $0x40] sm:$0xff]
    %v40 = vld [vmem:[%s1 + $0x48] sm:$0xff]
    %v41 = vld [vmem:[%s1 + $0x50] sm:$0xff]
    %v42 = vld [vmem:[%s1 + $0x58] sm:$0xff]
    %v43 = vld [vmem:[%s1 + $0x60] sm:$0xff]
    %v44 = vld [vmem:[%s1 + $0x68] sm:$0xff]
    %v45 = vld [vmem:[%s1 + $0x70] sm:$0xff]
    %v46 = vld [vmem:[%s1 + $0x78] sm:$0xff]
    %47 = vxpose.xlu0.b32.start [1/16] %v31, 128
    %48 = vxpose.xlu0.b32.cont [2/16] %v32, 128
    %49 = vxpose.xlu0.b32.cont [3/16] %v33, 128
    %50 = vxpose.xlu0.b32.cont [4/16] %v34, 128
    %51 = vxpose.xlu0.b32.cont [5/16] %v35, 128
    %52 = vxpose.xlu0.b32.cont [6/16] %v36, 128
    %53 = vxpose.xlu0.b32.cont [7/16] %v37, 128
    %54 = vxpose.xlu0.b32.cont [8/16] %v38, 128
    %55 = vxpose.xlu0.b32.cont [9/16] %v39, 128
    %56 = vxpose.xlu0.b32.cont [10/16] %v40, 128
    %57 = vxpose.xlu0.b32.cont [11/16] %v41, 128
    %58 = vxpose.xlu0.b32.cont [12/16] %v42, 128
    %59 = vxpose.xlu0.b32.cont [13/16] %v43, 128
    %60 = vxpose.xlu0.b32.cont [14/16] %v44, 128
    %61 = vxpose.xlu0.b32.cont [15/16] %v45, 128
    %62 = vxpose.xlu0.b32.end [16/16] %v46, 128
    %v63 = vpop.trf.xlu0
    %v64 = vpop.trf.xlu0
    %v65 = vpop.trf.xlu0
    %v66 = vpop.trf.xlu0
    %v67 = vpop.trf.xlu0
    %v68 = vpop.trf.xlu0
    %v69 = vpop.trf.xlu0
    %v70 = vpop.trf.xlu0
    %v71 = vpop.trf.xlu0
    %v72 = vpop.trf.xlu0
    %v73 = vpop.trf.xlu0
    %v74 = vpop.trf.xlu0
    %v75 = vpop.trf.xlu0
    %v76 = vpop.trf.xlu0
    %v77 = vpop.trf.xlu0
    %v78 = vpop.trf.xlu0
    %v79 = vmax.f32 %v15, %v63
    %v80 = vmax.f32 %v16, %v64
    %v81 = vmax.f32 %v17, %v65
    %v82 = vmax.f32 %v18, %v66
    %v83 = vmax.f32 %v19, %v67
    %v84 = vmax.f32 %v20, %v68
    %v85 = vmax.f32 %v21, %v69
    %v86 = vmax.f32 %v22, %v70
    %v87 = vmax.f32 %v23, %v71
    %v88 = vmax.f32 %v24, %v72
    %v89 = vmax.f32 %v25, %v73
    %v90 = vmax.f32 %v26, %v74
    %v91 = vmax.f32 %v27, %v75
    %v92 = vmax.f32 %v28, %v76
    %v93 = vmax.f32 %v29, %v77
    %v94 = vmax.f32 %v30, %v78
    %95 = vst [vmem:[#allocation2] sm:$0xff] %v79
    %96 = vst [vmem:[#allocation2 + $0x8] sm:$0xff] %v80
    %97 = vst [vmem:[#allocation2 + $0x10] sm:$0xff] %v81
    %98 = vst [vmem:[#allocation2 + $0x18] sm:$0xff] %v82
    %99 = vst [vmem:[#allocation2 + $0x20] sm:$0xff] %v83
    %100 = vst [vmem:[#allocation2 + $0x28] sm:$0xff] %v84
    %101 = vst [vmem:[#allocation2 + $0x30] sm:$0xff] %v85
    %102 = vst [vmem:[#allocation2 + $0x38] sm:$0xff] %v86
    %103 = vst [vmem:[#allocation2 + $0x40] sm:$0xff] %v87
    %104 = vst [vmem:[#allocation2 + $0x48] sm:$0xff] %v88
    %105 = vst [vmem:[#allocation2 + $0x50] sm:$0xff] %v89
    %106 = vst [vmem:[#allocation2 + $0x58] sm:$0xff] %v90
    %107 = vst [vmem:[#allocation2 + $0x60] sm:$0xff] %v91
    %108 = vst [vmem:[#allocation2 + $0x68] sm:$0xff] %v92
    %109 = vst [vmem:[#allocation2 + $0x70] sm:$0xff] %v93
    %110 = vst [vmem:[#allocation2 + $0x78] sm:$0xff] %v94
    %v111 = vlaneseq
    %v112 = vshrl.u32 %v111, 7
    %v113 = vadd.s32 %v112, 8
    %v114 = vadd.s32 %v112, 16
    %v115 = vadd.s32 %v112, 24
    %v116 = vadd.s32 %v112, 32
    %v117 = vadd.s32 %v112, 40
    %v118 = vadd.s32 %v112, 48
    %v119 = vadd.s32 %v112, 56
    %v120 = vadd.s32 %v112, 64
    %v121 = vadd.s32 %v112, 72
    %v122 = vadd.s32 %v112, 80
    %v123 = vadd.s32 %v112, 88
    %v124 = vadd.s32 %v112, 96
    %v125 = vadd.s32 %v112, 104
    %v126 = vadd.s32 %v112, 112
    %v127 = vadd.s32 %v112, 120
    %v128 = vlaneseq
    %v129 = vand.u32 %v128, 127
    %vm130 = vcmp.eq.s32.totalorder %v112, %v129
    %vm131 = vcmp.eq.s32.totalorder %v113, %v129
    %vm132 = vcmp.eq.s32.totalorder %v114, %v129
    %vm133 = vcmp.eq.s32.totalorder %v115, %v129
    %vm134 = vcmp.eq.s32.totalorder %v116, %v129
    %vm135 = vcmp.eq.s32.totalorder %v117, %v129
    %vm136 = vcmp.eq.s32.totalorder %v118, %v129
    %vm137 = vcmp.eq.s32.totalorder %v119, %v129
    %vm138 = vcmp.eq.s32.totalorder %v120, %v129
    %vm139 = vcmp.eq.s32.totalorder %v121, %v129
    %vm140 = vcmp.eq.s32.totalorder %v122, %v129
    %vm141 = vcmp.eq.s32.totalorder %v123, %v129
    %vm142 = vcmp.eq.s32.totalorder %v124, %v129
    %vm143 = vcmp.eq.s32.totalorder %v125, %v129
    %vm144 = vcmp.eq.s32.totalorder %v126, %v129
    %vm145 = vcmp.eq.s32.totalorder %v127, %v129
    %v146 = vsel %vm130, 1, 0
    %v147 = vsel %vm131, 1, 0
    %v148 = vsel %vm132, 1, 0
    %v149 = vsel %vm133, 1, 0
    %v150 = vsel %vm134, 1, 0
    %v151 = vsel %vm135, 1, 0
    %v152 = vsel %vm136, 1, 0
    %v153 = vsel %vm137, 1, 0
    %v154 = vsel %vm138, 1, 0
    %v155 = vsel %vm139, 1, 0
    %v156 = vsel %vm140, 1, 0
    %v157 = vsel %vm141, 1, 0
    %v158 = vsel %vm142, 1, 0
    %v159 = vsel %vm143, 1, 0
    %v160 = vsel %vm144, 1, 0
    %v161 = vsel %vm145, 1, 0
    %v162 = vcvt.s32.f32 %v146
    %v163 = vcvt.s32.f32 %v147
    %v164 = vcvt.s32.f32 %v148
    %v165 = vcvt.s32.f32 %v149
    %v166 = vcvt.s32.f32 %v150
    %v167 = vcvt.s32.f32 %v151
    %v168 = vcvt.s32.f32 %v152
    %v169 = vcvt.s32.f32 %v153
    %v170 = vcvt.s32.f32 %v154
    %v171 = vcvt.s32.f32 %v155
    %v172 = vcvt.s32.f32 %v156
    %v173 = vcvt.s32.f32 %v157
    %v174 = vcvt.s32.f32 %v158
    %v175 = vcvt.s32.f32 %v159
    %v176 = vcvt.s32.f32 %v160
    %v177 = vcvt.s32.f32 %v161
    %p178 = scmp.eq.s32.totalorder 0, 0
    %v179 = vadd.f32 %v79, %v162
    %v180 = vadd.f32 %v80, %v163
    %v181 = vadd.f32 %v81, %v164
    %v182 = vadd.f32 %v82, %v165
    %v183 = vadd.f32 %v83, %v166
    %v184 = vadd.f32 %v84, %v167
    %v185 = vadd.f32 %v85, %v168
    %v186 = vadd.f32 %v86, %v169
    %v187 = vadd.f32 %v87, %v170
    %v188 = vadd.f32 %v88, %v171
    %v189 = vadd.f32 %v89, %v172
    %v190 = vadd.f32 %v90, %v173
    %v191 = vadd.f32 %v91, %v174
    %v192 = vadd.f32 %v92, %v175
    %v193 = vadd.f32 %v93, %v176
    %v194 = vadd.f32 %v94, %v177
    %s195 = scalar_select %p178, 1, 0
    %v196 = vstv %s195
    %vm197 = vcmp.eq.s32.totalorder %v196, 1
    %v198 = vsel %vm197, %v179, %v79
    %v199 = vsel %vm197, %v180, %v80
    %v200 = vsel %vm197, %v181, %v81
    %v201 = vsel %vm197, %v182, %v82
    %v202 = vsel %vm197, %v183, %v83
    %v203 = vsel %vm197, %v184, %v84
    %v204 = vsel %vm197, %v185, %v85
    %v205 = vsel %vm197, %v186, %v86
    %v206 = vsel %vm197, %v187, %v87
    %v207 = vsel %vm197, %v188, %v88
    %v208 = vsel %vm197, %v189, %v89
    %v209 = vsel %vm197, %v190, %v90
    %v210 = vsel %vm197, %v191, %v91
    %v211 = vsel %vm197, %v192, %v92
    %v212 = vsel %vm197, %v193, %v93
    %v213 = vsel %vm197, %v194, %v94
    %v214 = vpack.c.bf16 %v199, %v198
    %v215 = vpack.c.bf16 %v201, %v200
    %v216 = vpack.c.bf16 %v203, %v202
    %v217 = vpack.c.bf16 %v205, %v204
    %v218 = vpack.c.bf16 %v207, %v206
    %v219 = vpack.c.bf16 %v209, %v208
    %v220 = vpack.c.bf16 %v211, %v210
    %v221 = vpack.c.bf16 %v213, %v212
    %v230 = vunpack.c.l.b16 %v214
    %v231 = vunpack.c.h.b16 %v214
    %v232 = vunpack.c.l.b16 %v215
    %v233 = vunpack.c.h.b16 %v215
    %v234 = vunpack.c.l.b16 %v216
    %v235 = vunpack.c.h.b16 %v216
    %v236 = vunpack.c.l.b16 %v217
    %v237 = vunpack.c.h.b16 %v217
    %v238 = vunpack.c.l.b16 %v218
    %v239 = vunpack.c.h.b16 %v218
    %v240 = vunpack.c.l.b16 %v219
    %v241 = vunpack.c.h.b16 %v219
    %v242 = vunpack.c.l.b16 %v220
    %v243 = vunpack.c.h.b16 %v220
    %v244 = vunpack.c.l.b16 %v221
    %v245 = vunpack.c.h.b16 %v221
    %v246 = vpack.c.b16 %v230, %v230
    %v247 = vpack.c.b16 %v231, %v231
    %v248 = vpack.c.b16 %v232, %v232
    %v249 = vpack.c.b16 %v233, %v233
    %v250 = vpack.c.b16 %v234, %v234
    %v251 = vpack.c.b16 %v235, %v235
    %v252 = vpack.c.b16 %v236, %v236
    %v253 = vpack.c.b16 %v237, %v237
    %v254 = vpack.c.b16 %v238, %v238
    %v255 = vpack.c.b16 %v239, %v239
    %v256 = vpack.c.b16 %v240, %v240
    %v257 = vpack.c.b16 %v241, %v241
    %v258 = vpack.c.b16 %v242, %v242
    %v259 = vpack.c.b16 %v243, %v243
    %v260 = vpack.c.b16 %v244, %v244
    %v261 = vpack.c.b16 %v245, %v245
    %278 = vst [vmem:[%s3] sm:$0xf] %v246
    %279 = vst [vmem:[%s3 + $0x4] sm:$0xf] %v247
    %280 = vst [vmem:[%s3 + $0x8] sm:$0xf] %v248
    %281 = vst [vmem:[%s3 + $0xc] sm:$0xf] %v249
    %282 = vst [vmem:[%s3 + $0x10] sm:$0xf] %v250
    %283 = vst [vmem:[%s3 + $0x14] sm:$0xf] %v251
    %284 = vst [vmem:[%s3 + $0x18] sm:$0xf] %v252
    %285 = vst [vmem:[%s3 + $0x1c] sm:$0xf] %v253
    %286 = vst [vmem:[%s3 + $0x20] sm:$0xf] %v254
    %287 = vst [vmem:[%s3 + $0x24] sm:$0xf] %v255
    %288 = vst [vmem:[%s3 + $0x28] sm:$0xf] %v256
    %289 = vst [vmem:[%s3 + $0x2c] sm:$0xf] %v257
    %290 = vst [vmem:[%s3 + $0x30] sm:$0xf] %v258
    %291 = vst [vmem:[%s3 + $0x34] sm:$0xf] %v259
    %292 = vst [vmem:[%s3 + $0x38] sm:$0xf] %v260
    %293 = vst [vmem:[%s3 + $0x3c] sm:$0xf] %v261
    %p294 = scmp.eq.s32.totalorder 0, 0
    // Predicated region
    $region10: #{agl_mgae_forward.9} parent=1 // pred_check
      %p295 = pneg %p294
    $region11: #{agl_mgae_forward.9} parent=1 // pred_check_branch
      %297 = sbr.rel (%p295) target = $region13
    $region12: #{agl_mgae_forward.9} parent=1 // pred_region
      %vm298 = vcmask 7168
      %299 = vst.msk [vmem:[%s4] sm:$0xff] %vm298, 1.0
      %300 = vst.msk [vmem:[%s4 + $0x8] sm:$0xff] %vm298, 1.0
      %301 = vst.msk [vmem:[%s4 + $0x10] sm:$0xff] %vm298, 1.0
      %302 = vst.msk [vmem:[%s4 + $0x18] sm:$0xff] %vm298, 1.0
      %303 = vst.msk [vmem:[%s4 + $0x20] sm:$0xff] %vm298, 1.0
      %304 = vst.msk [vmem:[%s4 + $0x28] sm:$0xff] %vm298, 1.0
      %305 = vst.msk [vmem:[%s4 + $0x30] sm:$0xff] %vm298, 1.0
      %306 = vst.msk [vmem:[%s4 + $0x38] sm:$0xff] %vm298, 1.0
      %307 = vst.msk [vmem:[%s4 + $0x40] sm:$0xff] %vm298, 1.0
      %308 = vst.msk [vmem:[%s4 + $0x48] sm:$0xff] %vm298, 1.0
      %309 = vst.msk [vmem:[%s4 + $0x50] sm:$0xff] %vm298, 1.0
      %310 = vst.msk [vmem:[%s4 + $0x58] sm:$0xff] %vm298, 1.0
      %311 = vst.msk [vmem:[%s4 + $0x60] sm:$0xff] %vm298, 1.0
      %312 = vst.msk [vmem:[%s4 + $0x68] sm:$0xff] %vm298, 1.0
      %313 = vst.msk [vmem:[%s4 + $0x70] sm:$0xff] %vm298, 1.0
      %314 = vst.msk [vmem:[%s4 + $0x78] sm:$0xff] %vm298, 1.0
    $region13: #{agl_mgae_forward.9} parent=1 // pred_fallthru
      _
    %v315 = vld [vmem:[%s4] sm:$0xff]
    %v316 = vld [vmem:[%s4 + $0x8] sm:$0xff]
    %v317 = vld [vmem:[%s4 + $0x10] sm:$0xff]
    %v318 = vld [vmem:[%s4 + $0x18] sm:$0xff]
    %v319 = vld [vmem:[%s4 + $0x20] sm:$0xff]
    %v320 = vld [vmem:[%s4 + $0x28] sm:$0xff]
    %v321 = vld [vmem:[%s4 + $0x30] sm:$0xff]
    %v322 = vld [vmem:[%s4 + $0x38] sm:$0xff]
    %v323 = vld [vmem:[%s4 + $0x40] sm:$0xff]
    %v324 = vld [vmem:[%s4 + $0x48] sm:$0xff]
    %v325 = vld [vmem:[%s4 + $0x50] sm:$0xff]
    %v326 = vld [vmem:[%s4 + $0x58] sm:$0xff]
    %v327 = vld [vmem:[%s4 + $0x60] sm:$0xff]
    %v328 = vld [vmem:[%s4 + $0x68] sm:$0xff]
    %v329 = vld [vmem:[%s4 + $0x70] sm:$0xff]
    %v330 = vld [vmem:[%s4 + $0x78] sm:$0xff]
    %331 = vadd.xlane.f32.xlu0 %v79
    %v332 = vpop.xlane.xlu0 %331
    %333 = vadd.xlane.f32.xlu0 %v80
    %v334 = vpop.xlane.xlu0 %333
    %335 = vadd.xlane.f32.xlu0 %v81
    %v336 = vpop.xlane.xlu0 %335
    %337 = vadd.xlane.f32.xlu0 %v82
    %v338 = vpop.xlane.xlu0 %337
    %339 = vadd.xlane.f32.xlu0 %v83
    %v340 = vpop.xlane.xlu0 %339
    %341 = vadd.xlane.f32.xlu0 %v84
    %v342 = vpop.xlane.xlu0 %341
    %343 = vadd.xlane.f32.xlu0 %v85
    %v344 = vpop.xlane.xlu0 %343
    %345 = vadd.xlane.f32.xlu0 %v86
    %v346 = vpop.xlane.xlu0 %345
    %347 = vadd.xlane.f32.xlu0 %v87
    %v348 = vpop.xlane.xlu0 %347
    %349 = vadd.xlane.f32.xlu0 %v88
    %v350 = vpop.xlane.xlu0 %349
    %351 = vadd.xlane.f32.xlu0 %v89
    %v352 = vpop.xlane.xlu0 %351
    %353 = vadd.xlane.f32.xlu0 %v90
    %v354 = vpop.xlane.xlu0 %353
    %355 = vadd.xlane.f32.xlu0 %v91
    %v356 = vpop.xlane.xlu0 %355
    %357 = vadd.xlane.f32.xlu0 %v92
    %v358 = vpop.xlane.xlu0 %357
    %359 = vadd.xlane.f32.xlu0 %v93
    %v360 = vpop.xlane.xlu0 %359
    %361 = vadd.xlane.f32.xlu0 %v94
    %v362 = vpop.xlane.xlu0 %361
    %v363 = vadd.f32 %v315, %v332
    %v364 = vadd.f32 %v316, %v334
    %v365 = vadd.f32 %v317, %v336
    %v366 = vadd.f32 %v318, %v338
    %v367 = vadd.f32 %v319, %v340
    %v368 = vadd.f32 %v320, %v342
    %v369 = vadd.f32 %v321, %v344
    %v370 = vadd.f32 %v322, %v346
    %v371 = vadd.f32 %v323, %v348
    %v372 = vadd.f32 %v324, %v350
    %v373 = vadd.f32 %v325, %v352
    %v374 = vadd.f32 %v326, %v354
    %v375 = vadd.f32 %v327, %v356
    %v376 = vadd.f32 %v328, %v358
    %v377 = vadd.f32 %v329, %v360
    %v378 = vadd.f32 %v330, %v362
    %vm379 = vcmask 7168
    %380 = vst.msk [vmem:[%s4] sm:$0xff] %vm379, %v363
    %381 = vst.msk [vmem:[%s4 + $0x8] sm:$0xff] %vm379, %v364
    %382 = vst.msk [vmem:[%s4 + $0x10] sm:$0xff] %vm379, %v365
    %383 = vst.msk [vmem:[%s4 + $0x18] sm:$0xff] %vm379, %v366
    %384 = vst.msk [vmem:[%s4 + $0x20] sm:$0xff] %vm379, %v367
    %385 = vst.msk [vmem:[%s4 + $0x28] sm:$0xff] %vm379, %v368
    %386 = vst.msk [vmem:[%s4 + $0x30] sm:$0xff] %vm379, %v369
    %387 = vst.msk [vmem:[%s4 + $0x38] sm:$0xff] %vm379, %v370
    %388 = vst.msk [vmem:[%s4 + $0x40] sm:$0xff] %vm379, %v371
    %389 = vst.msk [vmem:[%s4 + $0x48] sm:$0xff] %vm379, %v372
    %390 = vst.msk [vmem:[%s4 + $0x50] sm:$0xff] %vm379, %v373
    %391 = vst.msk [vmem:[%s4 + $0x58] sm:$0xff] %vm379, %v374
    %392 = vst.msk [vmem:[%s4 + $0x60] sm:$0xff] %vm379, %v375
    %393 = vst.msk [vmem:[%s4 + $0x68] sm:$0xff] %vm379, %v376
    %394 = vst.msk [vmem:[%s4 + $0x70] sm:$0xff] %vm379, %v377
    %395 = vst.msk [vmem:[%s4 + $0x78] sm:$0xff] %vm379, %v378
    // Predicated region
    $region14: #{agl_mgae_forward.9} parent=1 // pred_check
      _
    $region15: #{agl_mgae_forward.9} parent=1 // pred_check_branch
      %397 = sbr.rel (0) target = $region17
    $region16: #{agl_mgae_forward.9} parent=1 // pred_region
      %s399 = ssub.s32 2048, 2048
      %400 = vsyncadd [#allocation3], %s399
      %s401 = sshll.u32 [#allocation2], 4
      %s402 = int_to_ptr.vmem [resolvable:$true] %s401
      %407 = dma.vmem_to_hbm [thread:$0]  %s402, 2048, %s2, [#allocation3], 128, 128, 8
    $region17: #{agl_mgae_forward.9} parent=1 // pred_fallthru
      _
    // Predicated region
    $region18: #{agl_mgae_forward.9} parent=1 // pred_check
      _
    $region19: #{agl_mgae_forward.9} parent=1 // pred_check_branch
      %409 = sbr.rel (0) target = $region21
    $region20: #{agl_mgae_forward.9} parent=1 // pred_region
      _
    $region21: #{agl_mgae_forward.9} parent=1 // pred_fallthru
      _
    // Predicated region
    $region22: #{agl_mgae_forward.9} parent=1 // pred_check
      _
    $region23: #{agl_mgae_forward.9} parent=1 // pred_check_branch
      %411 = sbr.rel (0) target = $region25
    $region24: #{agl_mgae_forward.9} parent=1 // pred_region
      _
    $region25: #{agl_mgae_forward.9} parent=1 // pred_fallthru
      _
    // Predicated region
    $region26: #{agl_mgae_forward.9} parent=1 // pred_check
      _
    $region27: #{agl_mgae_forward.9} parent=1 // pred_check_branch
      %413 = sbr.rel (0) target = $region29
    $region28: #{agl_mgae_forward.9} parent=1 // pred_region
      %414 = dma.done [#allocation3], 2048
    $region29: #{agl_mgae_forward.9} parent=1 // pred_fallthru
      _
    // Predicated region
    $region30: #{agl_mgae_forward.9} parent=1 // pred_check
      _
    $region31: #{agl_mgae_forward.9} parent=1 // pred_check_branch
      %416 = sbr.rel (0) target = $region33
    $region32: #{agl_mgae_forward.9} parent=1 // pred_region
      _
    $region33: #{agl_mgae_forward.9} parent=1 // pred_fallthru
      _
    // Predicated region
    $region34: #{agl_mgae_forward.9} parent=1 // pred_check
      _
    $region35: #{agl_mgae_forward.9} parent=1 // pred_check_branch
      %418 = sbr.rel (0) target = $region37
    $region36: #{agl_mgae_forward.9} parent=1 // pred_region
      _
    $region37: #{agl_mgae_forward.9} parent=1 // pred_fallthru
      _
    %419 = vsyncpa [#allocation3], 1

// kernel: agl_mgae_forward.10
$region0: #{agl_mgae_forward.10}
  #allocation0 [shape = 'u32[]', space=smem, size = 0x4, offset = 0x4, fixed_abs, tag = 'smem constant byte address 0x4 - core index']
  #allocation1 [shape = 'u32[144,128]{1,0:T(1,128)}', space=vmem, size = 0x12000, scoped, tag = 'internal scratch']
  %s0 = inlined_call_operand.vmem [shape: f32[128,128], index: 0, kind: input, shape index: {}]
  %s1 = inlined_call_operand.vmem [shape: bf16[128,128], index: 1, kind: input, shape index: {}]
  %s2 = inlined_call_operand.vmem [shape: f32[128,1], index: 2, kind: input, shape index: {}]
  %s3 = inlined_call_operand.vmem [shape: bf16[128,128], index: 3, kind: output, shape index: {}]
  %s4 = sld [smem:[#allocation0]]
  $region22: #{agl_mgae_forward.10} parent=0
    _
  %s6 = ssub.s32 1, %s4
  %s7 = scalar_select 0, %s6, %s4
  // Predicated region
  $region2: #{agl_mgae_forward.10} parent=0 // pred_check
    _
  $region3: #{agl_mgae_forward.10} parent=0 // pred_check_branch
    %9 = sbr.rel (0) target = $region5
  $region4: #{agl_mgae_forward.10} parent=0 // pred_region
    _
  $region5: #{agl_mgae_forward.10} parent=0 // pred_fallthru
    _
  // Predicated region
  $region6: #{agl_mgae_forward.10} parent=0 // pred_check
    _
  $region7: #{agl_mgae_forward.10} parent=0 // pred_check_branch
    %11 = sbr.rel (0) target = $region9
  $region8: #{agl_mgae_forward.10} parent=0 // pred_region
    _
  $region9: #{agl_mgae_forward.10} parent=0 // pred_fallthru
    _
  // Predicated region
  $region10: #{agl_mgae_forward.10} parent=0 // pred_check
    _
  $region11: #{agl_mgae_forward.10} parent=0 // pred_check_branch
    %13 = sbr.rel (0) target = $region13
  $region12: #{agl_mgae_forward.10} parent=0 // pred_region
    _
  $region13: #{agl_mgae_forward.10} parent=0 // pred_fallthru
    _
  %v15 = vld [vmem:[%s0] sm:$0xff]
  %v16 = vld [vmem:[%s0 + $0x8] sm:$0xff]
  %v17 = vld [vmem:[%s0 + $0x10] sm:$0xff]
  %v18 = vld [vmem:[%s0 + $0x18] sm:$0xff]
  %v19 = vld [vmem:[%s0 + $0x20] sm:$0xff]
  %v20 = vld [vmem:[%s0 + $0x28] sm:$0xff]
  %v21 = vld [vmem:[%s0 + $0x30] sm:$0xff]
  %v22 = vld [vmem:[%s0 + $0x38] sm:$0xff]
  %v23 = vld [vmem:[%s0 + $0x40] sm:$0xff]
  %v24 = vld [vmem:[%s0 + $0x48] sm:$0xff]
  %v25 = vld [vmem:[%s0 + $0x50] sm:$0xff]
  %v26 = vld [vmem:[%s0 + $0x58] sm:$0xff]
  %v27 = vld [vmem:[%s0 + $0x60] sm:$0xff]
  %v28 = vld [vmem:[%s0 + $0x68] sm:$0xff]
  %v29 = vld [vmem:[%s0 + $0x70] sm:$0xff]
  %v30 = vld [vmem:[%s0 + $0x78] sm:$0xff]
  %v31 = vpack.c.bf16 %v16, %v15
  %v32 = vpack.c.bf16 %v18, %v17
  %v33 = vpack.c.bf16 %v20, %v19
  %v34 = vpack.c.bf16 %v22, %v21
  %v35 = vpack.c.bf16 %v24, %v23
  %v36 = vpack.c.bf16 %v26, %v25
  %v37 = vpack.c.bf16 %v28, %v27
  %v38 = vpack.c.bf16 %v30, %v29
  %v39 = vld [vmem:[%s1] sm:$0xf]
  %v40 = vld [vmem:[%s1 + $0x4] sm:$0xf]
  %v41 = vld [vmem:[%s1 + $0x8] sm:$0xf]
  %v42 = vld [vmem:[%s1 + $0xc] sm:$0xf]
  %v43 = vld [vmem:[%s1 + $0x10] sm:$0xf]
  %v44 = vld [vmem:[%s1 + $0x14] sm:$0xf]
  %v45 = vld [vmem:[%s1 + $0x18] sm:$0xf]
  %v46 = vld [vmem:[%s1 + $0x1c] sm:$0xf]
  %v47 = vld [vmem:[%s1 + $0x20] sm:$0xf]
  %v48 = vld [vmem:[%s1 + $0x24] sm:$0xf]
  %v49 = vld [vmem:[%s1 + $0x28] sm:$0xf]
  %v50 = vld [vmem:[%s1 + $0x2c] sm:$0xf]
  %v51 = vld [vmem:[%s1 + $0x30] sm:$0xf]
  %v52 = vld [vmem:[%s1 + $0x34] sm:$0xf]
  %v53 = vld [vmem:[%s1 + $0x38] sm:$0xf]
  %v54 = vld [vmem:[%s1 + $0x3c] sm:$0xf]
  %v71 = vunpack.c.l.b16 %v39
  %v72 = vunpack.c.l.b16 %v40
  %v73 = vunpack.c.l.b16 %v41
  %v74 = vunpack.c.l.b16 %v42
  %v75 = vunpack.c.l.b16 %v43
  %v76 = vunpack.c.l.b16 %v44
  %v77 = vunpack.c.l.b16 %v45
  %v78 = vunpack.c.l.b16 %v46
  %v79 = vunpack.c.l.b16 %v47
  %v80 = vunpack.c.l.b16 %v48
  %v81 = vunpack.c.l.b16 %v49
  %v82 = vunpack.c.l.b16 %v50
  %v83 = vunpack.c.l.b16 %v51
  %v84 = vunpack.c.l.b16 %v52
  %v85 = vunpack.c.l.b16 %v53
  %v86 = vunpack.c.l.b16 %v54
  %v87 = vpack.c.b16 %v72, %v71
  %v88 = vpack.c.b16 %v74, %v73
  %v89 = vpack.c.b16 %v76, %v75
  %v90 = vpack.c.b16 %v78, %v77
  %v91 = vpack.c.b16 %v80, %v79
  %v92 = vpack.c.b16 %v82, %v81
  %v93 = vpack.c.b16 %v84, %v83
  %v94 = vpack.c.b16 %v86, %v85
  %103 = vmatprep.subr.bf16.mxu0 0
  %104 = vmatpush1.bf16.msra.mxu0 %v87
  %105 = vmatprep.subr.bf16.mxu0 0
  %106 = vmatpush1.bf16.msra.mxu0 %v88
  %107 = vmatprep.subr.bf16.mxu0 0
  %108 = vmatpush1.bf16.msra.mxu0 %v89
  %109 = vmatprep.subr.bf16.mxu0 0
  %110 = vmatpush1.bf16.msra.mxu0 %v90
  %111 = vmatprep.subr.bf16.mxu0 0
  %112 = vmatpush1.bf16.msra.mxu0 %v91
  %113 = vmatprep.subr.bf16.mxu0 0
  %114 = vmatpush1.bf16.msra.mxu0 %v92
  %115 = vmatprep.subr.bf16.mxu0 0
  %116 = vmatpush1.bf16.msra.mxu0 %v93
  %117 = vmatprep.subr.bf16.mxu0 0
  %118 = vmatpush1.bf16.msra.mxu0 %v94
  %119 = vmatprep.subr.bf16.mxu0 0
  %120 = vmatpush1.bf16.msra.mxu0 0
  %121 = vmatprep.subr.bf16.mxu0 0
  %122 = vmatpush1.bf16.msra.mxu0 0
  %123 = vmatprep.subr.bf16.mxu0 0
  %124 = vmatpush1.bf16.msra.mxu0 0
  %125 = vmatprep.subr.bf16.mxu0 0
  %126 = vmatpush1.bf16.msra.mxu0 0
  %127 = vmatprep.subr.bf16.mxu0 0
  %128 = vmatpush1.bf16.msra.mxu0 0
  %129 = vmatprep.subr.bf16.mxu0 0
  %130 = vmatpush1.bf16.msra.mxu0 0
  %131 = vmatprep.subr.bf16.mxu0 0
  %132 = vmatpush1.bf16.msra.mxu0 0
  %133 = vmatprep.subr.bf16.mxu0 0
  %134 = vmatpush1.bf16.msra.mxu0 0
  %135 = vmatprep.mubr.bf16.mxu0 0
  %136 = vmatmul.mubr.bf16.gmra.mrb[0].mxu0 %v31
  %v137 = vpop.f32.mrb[0].mxu0
  %v138 = vadd.f32 0.0, %v137
  %v139 = vpop.f32.mrb[0].mxu0
  %v140 = vpop.f32.mrb[0].mxu0
  %v141 = vadd.f32 0.0, %v140
  %v142 = vpop.f32.mrb[0].mxu0
  %143 = vmatprep.mubr.bf16.mxu0 0
  %144 = vmatmul.mubr.bf16.gmra.mrb[0].mxu0 %v32
  %v145 = vpop.f32.mrb[0].mxu0
  %v146 = vadd.f32 0.0, %v145
  %v147 = vpop.f32.mrb[0].mxu0
  %v148 = vpop.f32.mrb[0].mxu0
  %v149 = vadd.f32 0.0, %v148
  %v150 = vpop.f32.mrb[0].mxu0
  %151 = vmatprep.mubr.bf16.mxu0 0
  %152 = vmatmul.mubr.bf16.gmra.mrb[0].mxu0 %v33
  %v153 = vpop.f32.mrb[0].mxu0
  %v154 = vadd.f32 0.0, %v153
  %v155 = vpop.f32.mrb[0].mxu0
  %v156 = vpop.f32.mrb[0].mxu0
  %v157 = vadd.f32 0.0, %v156
  %v158 = vpop.f32.mrb[0].mxu0
  %159 = vmatprep.mubr.bf16.mxu0 0
  %160 = vmatmul.mubr.bf16.gmra.mrb[0].mxu0 %v34
  %v161 = vpop.f32.mrb[0].mxu0
  %v162 = vadd.f32 0.0, %v161
  %v163 = vpop.f32.mrb[0].mxu0
  %v164 = vpop.f32.mrb[0].mxu0
  %v165 = vadd.f32 0.0, %v164
  %v166 = vpop.f32.mrb[0].mxu0
  %167 = vmatprep.mubr.bf16.mxu0 0
  %168 = vmatmul.mubr.bf16.gmra.mrb[0].mxu0 %v35
  %v169 = vpop.f32.mrb[0].mxu0
  %v170 = vadd.f32 0.0, %v169
  %v171 = vpop.f32.mrb[0].mxu0
  %v172 = vpop.f32.mrb[0].mxu0
  %v173 = vadd.f32 0.0, %v172
  %v174 = vpop.f32.mrb[0].mxu0
  %175 = vmatprep.mubr.bf16.mxu0 0
  %176 = vmatmul.mubr.bf16.gmra.mrb[0].mxu0 %v36
  %v177 = vpop.f32.mrb[0].mxu0
  %v178 = vadd.f32 0.0, %v177
  %v179 = vpop.f32.mrb[0].mxu0
  %v180 = vpop.f32.mrb[0].mxu0
  %v181 = vadd.f32 0.0, %v180
  %v182 = vpop.f32.mrb[0].mxu0
  %183 = vmatprep.mubr.bf16.mxu0 0
  %184 = vmatmul.mubr.bf16.gmra.mrb[0].mxu0 %v37
  %v185 = vpop.f32.mrb[0].mxu0
  %v186 = vadd.f32 0.0, %v185
  %v187 = vpop.f32.mrb[0].mxu0
  %v188 = vpop.f32.mrb[0].mxu0
  %v189 = vadd.f32 0.0, %v188
  %v190 = vpop.f32.mrb[0].mxu0
  %191 = vmatprep.mubr.bf16.mxu0 0
  %192 = vmatmul.mubr.bf16.gmra.mrb[0].mxu0 %v38
  %v193 = vpop.f32.mrb[0].mxu0
  %v194 = vadd.f32 0.0, %v193
  %v195 = vpop.f32.mrb[0].mxu0
  %v196 = vpop.f32.mrb[0].mxu0
  %v197 = vadd.f32 0.0, %v196
  %v198 = vpop.f32.mrb[0].mxu0
  %199 = vdwg.mxu0
  %v200 = vld [vmem:[%s2] sm:$0xff]
  %v201 = vld [vmem:[%s2 + $0x8] sm:$0xff]
  %v202 = vld [vmem:[%s2 + $0x10] sm:$0xff]
  %v203 = vld [vmem:[%s2 + $0x18] sm:$0xff]
  %v204 = vld [vmem:[%s2 + $0x20] sm:$0xff]
  %v205 = vld [vmem:[%s2 + $0x28] sm:$0xff]
  %v206 = vld [vmem:[%s2 + $0x30] sm:$0xff]
  %v207 = vld [vmem:[%s2 + $0x38] sm:$0xff]
  %v208 = vld [vmem:[%s2 + $0x40] sm:$0xff]
  %v209 = vld [vmem:[%s2 + $0x48] sm:$0xff]
  %v210 = vld [vmem:[%s2 + $0x50] sm:$0xff]
  %v211 = vld [vmem:[%s2 + $0x58] sm:$0xff]
  %v212 = vld [vmem:[%s2 + $0x60] sm:$0xff]
  %v213 = vld [vmem:[%s2 + $0x68] sm:$0xff]
  %v214 = vld [vmem:[%s2 + $0x70] sm:$0xff]
  %v215 = vld [vmem:[%s2 + $0x78] sm:$0xff]
  %217 = vset.pattern.permute.xlu0 0
  %218 = vperm.xlu0 %217, %v200
  %v219 = vpop.permute.xlu0 %218
  %222 = vset.pattern.permute.xlu0 0
  %223 = vperm.xlu0 %222, %v201
  %v224 = vpop.permute.xlu0 %223
  %227 = vset.pattern.permute.xlu0 0
  %228 = vperm.xlu0 %227, %v202
  %v229 = vpop.permute.xlu0 %228
  %232 = vset.pattern.permute.xlu0 0
  %233 = vperm.xlu0 %232, %v203
  %v234 = vpop.permute.xlu0 %233
  %237 = vset.pattern.permute.xlu0 0
  %238 = vperm.xlu0 %237, %v204
  %v239 = vpop.permute.xlu0 %238
  %242 = vset.pattern.permute.xlu0 0
  %243 = vperm.xlu0 %242, %v205
  %v244 = vpop.permute.xlu0 %243
  %247 = vset.pattern.permute.xlu0 0
  %248 = vperm.xlu0 %247, %v206
  %v249 = vpop.permute.xlu0 %248
  %252 = vset.pattern.permute.xlu0 0
  %253 = vperm.xlu0 %252, %v207
  %v254 = vpop.permute.xlu0 %253
  %257 = vset.pattern.permute.xlu0 0
  %258 = vperm.xlu0 %257, %v208
  %v259 = vpop.permute.xlu0 %258
  %262 = vset.pattern.permute.xlu0 0
  %263 = vperm.xlu0 %262, %v209
  %v264 = vpop.permute.xlu0 %263
  %267 = vset.pattern.permute.xlu0 0
  %268 = vperm.xlu0 %267, %v210
  %v269 = vpop.permute.xlu0 %268
  %272 = vset.pattern.permute.xlu0 0
  %273 = vperm.xlu0 %272, %v211
  %v274 = vpop.permute.xlu0 %273
  %277 = vset.pattern.permute.xlu0 0
  %278 = vperm.xlu0 %277, %v212
  %v279 = vpop.permute.xlu0 %278
  %282 = vset.pattern.permute.xlu0 0
  %283 = vperm.xlu0 %282, %v213
  %v284 = vpop.permute.xlu0 %283
  %287 = vset.pattern.permute.xlu0 0
  %288 = vperm.xlu0 %287, %v214
  %v289 = vpop.permute.xlu0 %288
  %292 = vset.pattern.permute.xlu0 0
  %293 = vperm.xlu0 %292, %v215
  %v294 = vpop.permute.xlu0 %293
  %v296 = vmul.f32 %v219, %v138
  %v297 = vmul.f32 %v224, %v141
  %v298 = vmul.f32 %v229, %v146
  %v299 = vmul.f32 %v234, %v149
  %v300 = vmul.f32 %v239, %v154
  %v301 = vmul.f32 %v244, %v157
  %v302 = vmul.f32 %v249, %v162
  %v303 = vmul.f32 %v254, %v165
  %v304 = vmul.f32 %v259, %v170
  %v305 = vmul.f32 %v264, %v173
  %v306 = vmul.f32 %v269, %v178
  %v307 = vmul.f32 %v274, %v181
  %v308 = vmul.f32 %v279, %v186
  %v309 = vmul.f32 %v284, %v189
  %v310 = vmul.f32 %v289, %v194
  %v311 = vmul.f32 %v294, %v197
  %v312 = vpack.c.bf16 %v297, %v296
  %v313 = vpack.c.bf16 %v299, %v298
  %v314 = vpack.c.bf16 %v301, %v300
  %v315 = vpack.c.bf16 %v303, %v302
  %v316 = vpack.c.bf16 %v305, %v304
  %v317 = vpack.c.bf16 %v307, %v306
  %v318 = vpack.c.bf16 %v309, %v308
  %v319 = vpack.c.bf16 %v311, %v310
  %v328 = vunpack.c.l.b16 %v312
  %v329 = vunpack.c.h.b16 %v312
  %v330 = vunpack.c.l.b16 %v313
  %v331 = vunpack.c.h.b16 %v313
  %v332 = vunpack.c.l.b16 %v314
  %v333 = vunpack.c.h.b16 %v314
  %v334 = vunpack.c.l.b16 %v315
  %v335 = vunpack.c.h.b16 %v315
  %v336 = vunpack.c.l.b16 %v316
  %v337 = vunpack.c.h.b16 %v316
  %v338 = vunpack.c.l.b16 %v317
  %v339 = vunpack.c.h.b16 %v317
  %v340 = vunpack.c.l.b16 %v318
  %v341 = vunpack.c.h.b16 %v318
  %v342 = vunpack.c.l.b16 %v319
  %v343 = vunpack.c.h.b16 %v319
  %v344 = vpack.c.b16 %v328, %v328
  %v345 = vpack.c.b16 %v329, %v329
  %v346 = vpack.c.b16 %v330, %v330
  %v347 = vpack.c.b16 %v331, %v331
  %v348 = vpack.c.b16 %v332, %v332
  %v349 = vpack.c.b16 %v333, %v333
  %v350 = vpack.c.b16 %v334, %v334
  %v351 = vpack.c.b16 %v335, %v335
  %v352 = vpack.c.b16 %v336, %v336
  %v353 = vpack.c.b16 %v337, %v337
  %v354 = vpack.c.b16 %v338, %v338
  %v355 = vpack.c.b16 %v339, %v339
  %v356 = vpack.c.b16 %v340, %v340
  %v357 = vpack.c.b16 %v341, %v341
  %v358 = vpack.c.b16 %v342, %v342
  %v359 = vpack.c.b16 %v343, %v343
  %376 = vst [vmem:[%s3] sm:$0xf] %v344
  %377 = vst [vmem:[%s3 + $0x4] sm:$0xf] %v345
  %378 = vst [vmem:[%s3 + $0x8] sm:$0xf] %v346
  %379 = vst [vmem:[%s3 + $0xc] sm:$0xf] %v347
  %380 = vst [vmem:[%s3 + $0x10] sm:$0xf] %v348
  %381 = vst [vmem:[%s3 + $0x14] sm:$0xf] %v349
  %382 = vst [vmem:[%s3 + $0x18] sm:$0xf] %v350
  %383 = vst [vmem:[%s3 + $0x1c] sm:$0xf] %v351
  %384 = vst [vmem:[%s3 + $0x20] sm:$0xf] %v352
  %385 = vst [vmem:[%s3 + $0x24] sm:$0xf] %v353
  %386 = vst [vmem:[%s3 + $0x28] sm:$0xf] %v354
  %387 = vst [vmem:[%s3 + $0x2c] sm:$0xf] %v355
  %388 = vst [vmem:[%s3 + $0x30] sm:$0xf] %v356
  %389 = vst [vmem:[%s3 + $0x34] sm:$0xf] %v357
  %390 = vst [vmem:[%s3 + $0x38] sm:$0xf] %v358
  %391 = vst [vmem:[%s3 + $0x3c] sm:$0xf] %v359
  // Predicated region
  $region14: #{agl_mgae_forward.10} parent=0 // pred_check
    _
  $region15: #{agl_mgae_forward.10} parent=0 // pred_check_branch
    %393 = sbr.rel (0) target = $region17
  $region16: #{agl_mgae_forward.10} parent=0 // pred_region
    _
  $region17: #{agl_mgae_forward.10} parent=0 // pred_fallthru
    _
  // Predicated region
  $region18: #{agl_mgae_forward.10} parent=0 // pred_check
    _
  $region19: #{agl_mgae_forward.10} parent=0 // pred_check_branch
    %395 = sbr.rel (0) target = $region21
  $region20: #{agl_mgae_forward.10} parent=0 // pred_region
    _
  $region21: #{agl_mgae_forward.10} parent=0 // pred_fallthru
    _

// kernel: agl_mgae_forward.11
$region0: #{agl_mgae_forward.11}
  #allocation0 [shape = 'u32[]', space=smem, size = 0x4, offset = 0x4, fixed_abs, tag = 'smem constant byte address 0x4 - core index']
  #allocation1 [shape = 'u32[144,128]{1,0:T(1,128)}', space=vmem, size = 0x12000, scoped, tag = 'internal scratch']
  #allocation2 [shape = 'f32[128,128]{1,0:T(8,128)}', space=vmem, size = 0x10000, scoped, tag = 'scratch operand']
  %s0 = inlined_call_operand.vmem [shape: bf16[128,128], index: 0, kind: input, shape index: {}]
  %s1 = inlined_call_operand.vmem [shape: bf16[128,128], index: 1, kind: input, shape index: {}]
  %s2 = inlined_call_operand.vmem [shape: f32[128,1], index: 2, kind: input, shape index: {}]
  %s3 = inlined_call_operand.vmem [shape: f32[1,128], index: 3, kind: input, shape index: {}]
  %s4 = inlined_call_operand.vmem [shape: f32[128,128], index: 4, kind: output, shape index: {}]
  %s5 = sld [smem:[#allocation0]]
  $region34: #{agl_mgae_forward.11} parent=0
    _
  %s7 = ssub.s32 1, %s5
  %s8 = scalar_select 0, %s7, %s5
  // Predicated region
  $region2: #{agl_mgae_forward.11} parent=0 // pred_check
    _
  $region3: #{agl_mgae_forward.11} parent=0 // pred_check_branch
    %10 = sbr.rel (0) target = $region5
  $region4: #{agl_mgae_forward.11} parent=0 // pred_region
    _
  $region5: #{agl_mgae_forward.11} parent=0 // pred_fallthru
    _
  // Predicated region
  $region6: #{agl_mgae_forward.11} parent=0 // pred_check
    _
  $region7: #{agl_mgae_forward.11} parent=0 // pred_check_branch
    %12 = sbr.rel (0) target = $region9
  $region8: #{agl_mgae_forward.11} parent=0 // pred_region
    _
  $region9: #{agl_mgae_forward.11} parent=0 // pred_fallthru
    _
  // Predicated region
  $region10: #{agl_mgae_forward.11} parent=0 // pred_check
    _
  $region11: #{agl_mgae_forward.11} parent=0 // pred_check_branch
    %14 = sbr.rel (0) target = $region13
  $region12: #{agl_mgae_forward.11} parent=0 // pred_region
    _
  $region13: #{agl_mgae_forward.11} parent=0 // pred_fallthru
    _
  // Predicated region
  $region14: #{agl_mgae_forward.11} parent=0 // pred_check
    _
  $region15: #{agl_mgae_forward.11} parent=0 // pred_check_branch
    %16 = sbr.rel (0) target = $region17
  $region16: #{agl_mgae_forward.11} parent=0 // pred_region
    _
  $region17: #{agl_mgae_forward.11} parent=0 // pred_fallthru
    _
  %p18 = scmp.eq.s32.totalorder 0, 0
  // Predicated region
  $region18: #{agl_mgae_forward.11} parent=0 // pred_check
    %p19 = pneg %p18
  $region19: #{agl_mgae_forward.11} parent=0 // pred_check_branch
    %21 = sbr.rel (%p19) target = $region21
  $region20: #{agl_mgae_forward.11} parent=0 // pred_region
    %22 = vst [vmem:[#allocation2] sm:$0xff] 0.0
    %23 = vst [vmem:[#allocation2 + $0x8] sm:$0xff] 0.0
    %24 = vst [vmem:[#allocation2 + $0x10] sm:$0xff] 0.0
    %25 = vst [vmem:[#allocation2 + $0x18] sm:$0xff] 0.0
    %26 = vst [vmem:[#allocation2 + $0x20] sm:$0xff] 0.0
    %27 = vst [vmem:[#allocation2 + $0x28] sm:$0xff] 0.0
    %28 = vst [vmem:[#allocation2 + $0x30] sm:$0xff] 0.0
    %29 = vst [vmem:[#allocation2 + $0x38] sm:$0xff] 0.0
    %30 = vst [vmem:[#allocation2 + $0x40] sm:$0xff] 0.0
    %31 = vst [vmem:[#allocation2 + $0x48] sm:$0xff] 0.0
    %32 = vst [vmem:[#allocation2 + $0x50] sm:$0xff] 0.0
    %33 = vst [vmem:[#allocation2 + $0x58] sm:$0xff] 0.0
    %34 = vst [vmem:[#allocation2 + $0x60] sm:$0xff] 0.0
    %35 = vst [vmem:[#allocation2 + $0x68] sm:$0xff] 0.0
    %36 = vst [vmem:[#allocation2 + $0x70] sm:$0xff] 0.0
    %37 = vst [vmem:[#allocation2 + $0x78] sm:$0xff] 0.0
  $region21: #{agl_mgae_forward.11} parent=0 // pred_fallthru
    _
  %v38 = vld [vmem:[#allocation2] sm:$0xff]
  %v39 = vld [vmem:[#allocation2 + $0x8] sm:$0xff]
  %v40 = vld [vmem:[#allocation2 + $0x10] sm:$0xff]
  %v41 = vld [vmem:[#allocation2 + $0x18] sm:$0xff]
  %v42 = vld [vmem:[#allocation2 + $0x20] sm:$0xff]
  %v43 = vld [vmem:[#allocation2 + $0x28] sm:$0xff]
  %v44 = vld [vmem:[#allocation2 + $0x30] sm:$0xff]
  %v45 = vld [vmem:[#allocation2 + $0x38] sm:$0xff]
  %v46 = vld [vmem:[#allocation2 + $0x40] sm:$0xff]
  %v47 = vld [vmem:[#allocation2 + $0x48] sm:$0xff]
  %v48 = vld [vmem:[#allocation2 + $0x50] sm:$0xff]
  %v49 = vld [vmem:[#allocation2 + $0x58] sm:$0xff]
  %v50 = vld [vmem:[#allocation2 + $0x60] sm:$0xff]
  %v51 = vld [vmem:[#allocation2 + $0x68] sm:$0xff]
  %v52 = vld [vmem:[#allocation2 + $0x70] sm:$0xff]
  %v53 = vld [vmem:[#allocation2 + $0x78] sm:$0xff]
  %v54 = vld [vmem:[%s0] sm:$0xf]
  %v55 = vld [vmem:[%s0 + $0x4] sm:$0xf]
  %v56 = vld [vmem:[%s0 + $0x8] sm:$0xf]
  %v57 = vld [vmem:[%s0 + $0xc] sm:$0xf]
  %v58 = vld [vmem:[%s0 + $0x10] sm:$0xf]
  %v59 = vld [vmem:[%s0 + $0x14] sm:$0xf]
  %v60 = vld [vmem:[%s0 + $0x18] sm:$0xf]
  %v61 = vld [vmem:[%s0 + $0x1c] sm:$0xf]
  %v62 = vld [vmem:[%s0 + $0x20] sm:$0xf]
  %v63 = vld [vmem:[%s0 + $0x24] sm:$0xf]
  %v64 = vld [vmem:[%s0 + $0x28] sm:$0xf]
  %v65 = vld [vmem:[%s0 + $0x2c] sm:$0xf]
  %v66 = vld [vmem:[%s0 + $0x30] sm:$0xf]
  %v67 = vld [vmem:[%s0 + $0x34] sm:$0xf]
  %v68 = vld [vmem:[%s0 + $0x38] sm:$0xf]
  %v69 = vld [vmem:[%s0 + $0x3c] sm:$0xf]
  %v70 = vld [vmem:[%s1] sm:$0xf]
  %v71 = vld [vmem:[%s1 + $0x4] sm:$0xf]
  %v72 = vld [vmem:[%s1 + $0x8] sm:$0xf]
  %v73 = vld [vmem:[%s1 + $0xc] sm:$0xf]
  %v74 = vld [vmem:[%s1 + $0x10] sm:$0xf]
  %v75 = vld [vmem:[%s1 + $0x14] sm:$0xf]
  %v76 = vld [vmem:[%s1 + $0x18] sm:$0xf]
  %v77 = vld [vmem:[%s1 + $0x1c] sm:$0xf]
  %v78 = vld [vmem:[%s1 + $0x20] sm:$0xf]
  %v79 = vld [vmem:[%s1 + $0x24] sm:$0xf]
  %v80 = vld [vmem:[%s1 + $0x28] sm:$0xf]
  %v81 = vld [vmem:[%s1 + $0x2c] sm:$0xf]
  %v82 = vld [vmem:[%s1 + $0x30] sm:$0xf]
  %v83 = vld [vmem:[%s1 + $0x34] sm:$0xf]
  %v84 = vld [vmem:[%s1 + $0x38] sm:$0xf]
  %v85 = vld [vmem:[%s1 + $0x3c] sm:$0xf]
  %v102 = vunpack.c.l.b16 %v54
  %v103 = vunpack.c.l.b16 %v55
  %v104 = vunpack.c.l.b16 %v56
  %v105 = vunpack.c.l.b16 %v57
  %v106 = vunpack.c.l.b16 %v58
  %v107 = vunpack.c.l.b16 %v59
  %v108 = vunpack.c.l.b16 %v60
  %v109 = vunpack.c.l.b16 %v61
  %v110 = vunpack.c.l.b16 %v62
  %v111 = vunpack.c.l.b16 %v63
  %v112 = vunpack.c.l.b16 %v64
  %v113 = vunpack.c.l.b16 %v65
  %v114 = vunpack.c.l.b16 %v66
  %v115 = vunpack.c.l.b16 %v67
  %v116 = vunpack.c.l.b16 %v68
  %v117 = vunpack.c.l.b16 %v69
  %v118 = vpack.c.b16 %v103, %v102
  %v119 = vpack.c.b16 %v105, %v104
  %v120 = vpack.c.b16 %v107, %v106
  %v121 = vpack.c.b16 %v109, %v108
  %v122 = vpack.c.b16 %v111, %v110
  %v123 = vpack.c.b16 %v113, %v112
  %v124 = vpack.c.b16 %v115, %v114
  %v125 = vpack.c.b16 %v117, %v116
  %v150 = vunpack.c.l.b16 %v70
  %v151 = vunpack.c.l.b16 %v71
  %v152 = vunpack.c.l.b16 %v72
  %v153 = vunpack.c.l.b16 %v73
  %v154 = vunpack.c.l.b16 %v74
  %v155 = vunpack.c.l.b16 %v75
  %v156 = vunpack.c.l.b16 %v76
  %v157 = vunpack.c.l.b16 %v77
  %v158 = vunpack.c.l.b16 %v78
  %v159 = vunpack.c.l.b16 %v79
  %v160 = vunpack.c.l.b16 %v80
  %v161 = vunpack.c.l.b16 %v81
  %v162 = vunpack.c.l.b16 %v82
  %v163 = vunpack.c.l.b16 %v83
  %v164 = vunpack.c.l.b16 %v84
  %v165 = vunpack.c.l.b16 %v85
  %v166 = vpack.c.b16 %v151, %v150
  %v167 = vpack.c.b16 %v153, %v152
  %v168 = vpack.c.b16 %v155, %v154
  %v169 = vpack.c.b16 %v157, %v156
  %v170 = vpack.c.b16 %v159, %v158
  %v171 = vpack.c.b16 %v161, %v160
  %v172 = vpack.c.b16 %v163, %v162
  %v173 = vpack.c.b16 %v165, %v164
  %182 = vmatprep.subr.bf16.mxu0 0
  %183 = vmatpush1.bf16.msra.mxu0 %v166
  %184 = vmatprep.subr.bf16.mxu0 0
  %185 = vmatpush1.bf16.msra.mxu0 %v167
  %186 = vmatprep.subr.bf16.mxu0 0
  %187 = vmatpush1.bf16.msra.mxu0 %v168
  %188 = vmatprep.subr.bf16.mxu0 0
  %189 = vmatpush1.bf16.msra.mxu0 %v169
  %190 = vmatprep.subr.bf16.mxu0 0
  %191 = vmatpush1.bf16.msra.mxu0 %v170
  %192 = vmatprep.subr.bf16.mxu0 0
  %193 = vmatpush1.bf16.msra.mxu0 %v171
  %194 = vmatprep.subr.bf16.mxu0 0
  %195 = vmatpush1.bf16.msra.mxu0 %v172
  %196 = vmatprep.subr.bf16.mxu0 0
  %197 = vmatpush1.bf16.msra.mxu0 %v173
  %198 = vmatprep.subr.bf16.mxu0 0
  %199 = vmatpush1.bf16.msra.mxu0 0
  %200 = vmatprep.subr.bf16.mxu0 0
  %201 = vmatpush1.bf16.msra.mxu0 0
  %202 = vmatprep.subr.bf16.mxu0 0
  %203 = vmatpush1.bf16.msra.mxu0 0
  %204 = vmatprep.subr.bf16.mxu0 0
  %205 = vmatpush1.bf16.msra.mxu0 0
  %206 = vmatprep.subr.bf16.mxu0 0
  %207 = vmatpush1.bf16.msra.mxu0 0
  %208 = vmatprep.subr.bf16.mxu0 0
  %209 = vmatpush1.bf16.msra.mxu0 0
  %210 = vmatprep.subr.bf16.mxu0 0
  %211 = vmatpush1.bf16.msra.mxu0 0
  %212 = vmatprep.subr.bf16.mxu0 0
  %213 = vmatpush1.bf16.msra.mxu0 0
  %214 = vmatprep.mubr.bf16.mxu0 0
  %215 = vmatmul.mubr.bf16.gmra.mrb[0].mxu0 %v118
  %v216 = vpop.f32.mrb[0].mxu0
  %v217 = vadd.f32 0.0, %v216
  %v218 = vpop.f32.mrb[0].mxu0
  %v219 = vpop.f32.mrb[0].mxu0
  %v220 = vadd.f32 0.0, %v219
  %v221 = vpop.f32.mrb[0].mxu0
  %222 = vmatprep.mubr.bf16.mxu0 0
  %223 = vmatmul.mubr.bf16.gmra.mrb[0].mxu0 %v119
  %v224 = vpop.f32.mrb[0].mxu0
  %v225 = vadd.f32 0.0, %v224
  %v226 = vpop.f32.mrb[0].mxu0
  %v227 = vpop.f32.mrb[0].mxu0
  %v228 = vadd.f32 0.0, %v227
  %v229 = vpop.f32.mrb[0].mxu0
  %230 = vmatprep.mubr.bf16.mxu0 0
  %231 = vmatmul.mubr.bf16.gmra.mrb[0].mxu0 %v120
  %v232 = vpop.f32.mrb[0].mxu0
  %v233 = vadd.f32 0.0, %v232
  %v234 = vpop.f32.mrb[0].mxu0
  %v235 = vpop.f32.mrb[0].mxu0
  %v236 = vadd.f32 0.0, %v235
  %v237 = vpop.f32.mrb[0].mxu0
  %238 = vmatprep.mubr.bf16.mxu0 0
  %239 = vmatmul.mubr.bf16.gmra.mrb[0].mxu0 %v121
  %v240 = vpop.f32.mrb[0].mxu0
  %v241 = vadd.f32 0.0, %v240
  %v242 = vpop.f32.mrb[0].mxu0
  %v243 = vpop.f32.mrb[0].mxu0
  %v244 = vadd.f32 0.0, %v243
  %v245 = vpop.f32.mrb[0].mxu0
  %246 = vmatprep.mubr.bf16.mxu0 0
  %247 = vmatmul.mubr.bf16.gmra.mrb[0].mxu0 %v122
  %v248 = vpop.f32.mrb[0].mxu0
  %v249 = vadd.f32 0.0, %v248
  %v250 = vpop.f32.mrb[0].mxu0
  %v251 = vpop.f32.mrb[0].mxu0
  %v252 = vadd.f32 0.0, %v251
  %v253 = vpop.f32.mrb[0].mxu0
  %254 = vmatprep.mubr.bf16.mxu0 0
  %255 = vmatmul.mubr.bf16.gmra.mrb[0].mxu0 %v123
  %v256 = vpop.f32.mrb[0].mxu0
  %v257 = vadd.f32 0.0, %v256
  %v258 = vpop.f32.mrb[0].mxu0
  %v259 = vpop.f32.mrb[0].mxu0
  %v260 = vadd.f32 0.0, %v259
  %v261 = vpop.f32.mrb[0].mxu0
  %262 = vmatprep.mubr.bf16.mxu0 0
  %263 = vmatmul.mubr.bf16.gmra.mrb[0].mxu0 %v124
  %v264 = vpop.f32.mrb[0].mxu0
  %v265 = vadd.f32 0.0, %v264
  %v266 = vpop.f32.mrb[0].mxu0
  %v267 = vpop.f32.mrb[0].mxu0
  %v268 = vadd.f32 0.0, %v267
  %v269 = vpop.f32.mrb[0].mxu0
  %270 = vmatprep.mubr.bf16.mxu0 0
  %271 = vmatmul.mubr.bf16.gmra.mrb[0].mxu0 %v125
  %v272 = vpop.f32.mrb[0].mxu0
  %v273 = vadd.f32 0.0, %v272
  %v274 = vpop.f32.mrb[0].mxu0
  %v275 = vpop.f32.mrb[0].mxu0
  %v276 = vadd.f32 0.0, %v275
  %v277 = vpop.f32.mrb[0].mxu0
  %278 = vdwg.mxu0
  %v279 = vadd.f32 %v38, %v217
  %v280 = vadd.f32 %v39, %v220
  %v281 = vadd.f32 %v40, %v225
  %v282 = vadd.f32 %v41, %v228
  %v283 = vadd.f32 %v42, %v233
  %v284 = vadd.f32 %v43, %v236
  %v285 = vadd.f32 %v44, %v241
  %v286 = vadd.f32 %v45, %v244
  %v287 = vadd.f32 %v46, %v249
  %v288 = vadd.f32 %v47, %v252
  %v289 = vadd.f32 %v48, %v257
  %v290 = vadd.f32 %v49, %v260
  %v291 = vadd.f32 %v50, %v265
  %v292 = vadd.f32 %v51, %v268
  %v293 = vadd.f32 %v52, %v273
  %v294 = vadd.f32 %v53, %v276
  %295 = vst [vmem:[#allocation2] sm:$0xff] %v279
  %296 = vst [vmem:[#allocation2 + $0x8] sm:$0xff] %v280
  %297 = vst [vmem:[#allocation2 + $0x10] sm:$0xff] %v281
  %298 = vst [vmem:[#allocation2 + $0x18] sm:$0xff] %v282
  %299 = vst [vmem:[#allocation2 + $0x20] sm:$0xff] %v283
  %300 = vst [vmem:[#allocation2 + $0x28] sm:$0xff] %v284
  %301 = vst [vmem:[#allocation2 + $0x30] sm:$0xff] %v285
  %302 = vst [vmem:[#allocation2 + $0x38] sm:$0xff] %v286
  %303 = vst [vmem:[#allocation2 + $0x40] sm:$0xff] %v287
  %304 = vst [vmem:[#allocation2 + $0x48] sm:$0xff] %v288
  %305 = vst [vmem:[#allocation2 + $0x50] sm:$0xff] %v289
  %306 = vst [vmem:[#allocation2 + $0x58] sm:$0xff] %v290
  %307 = vst [vmem:[#allocation2 + $0x60] sm:$0xff] %v291
  %308 = vst [vmem:[#allocation2 + $0x68] sm:$0xff] %v292
  %309 = vst [vmem:[#allocation2 + $0x70] sm:$0xff] %v293
  %310 = vst [vmem:[#allocation2 + $0x78] sm:$0xff] %v294
  // Predicated region
  $region22: #{agl_mgae_forward.11} parent=0 // pred_check
    %p311 = pneg %p18
  $region23: #{agl_mgae_forward.11} parent=0 // pred_check_branch
    %313 = sbr.rel (%p311) target = $region25
  $region24: #{agl_mgae_forward.11} parent=0 // pred_region
    %v314 = vld [vmem:[%s2] sm:$0xff]
    %v315 = vld [vmem:[%s2 + $0x8] sm:$0xff]
    %v316 = vld [vmem:[%s2 + $0x10] sm:$0xff]
    %v317 = vld [vmem:[%s2 + $0x18] sm:$0xff]
    %v318 = vld [vmem:[%s2 + $0x20] sm:$0xff]
    %v319 = vld [vmem:[%s2 + $0x28] sm:$0xff]
    %v320 = vld [vmem:[%s2 + $0x30] sm:$0xff]
    %v321 = vld [vmem:[%s2 + $0x38] sm:$0xff]
    %v322 = vld [vmem:[%s2 + $0x40] sm:$0xff]
    %v323 = vld [vmem:[%s2 + $0x48] sm:$0xff]
    %v324 = vld [vmem:[%s2 + $0x50] sm:$0xff]
    %v325 = vld [vmem:[%s2 + $0x58] sm:$0xff]
    %v326 = vld [vmem:[%s2 + $0x60] sm:$0xff]
    %v327 = vld [vmem:[%s2 + $0x68] sm:$0xff]
    %v328 = vld [vmem:[%s2 + $0x70] sm:$0xff]
    %v329 = vld [vmem:[%s2 + $0x78] sm:$0xff]
    %v330 = vld [vmem:[#allocation2] sm:$0xff]
    %v331 = vld [vmem:[#allocation2 + $0x8] sm:$0xff]
    %v332 = vld [vmem:[#allocation2 + $0x10] sm:$0xff]
    %v333 = vld [vmem:[#allocation2 + $0x18] sm:$0xff]
    %v334 = vld [vmem:[#allocation2 + $0x20] sm:$0xff]
    %v335 = vld [vmem:[#allocation2 + $0x28] sm:$0xff]
    %v336 = vld [vmem:[#allocation2 + $0x30] sm:$0xff]
    %v337 = vld [vmem:[#allocation2 + $0x38] sm:$0xff]
    %v338 = vld [vmem:[#allocation2 + $0x40] sm:$0xff]
    %v339 = vld [vmem:[#allocation2 + $0x48] sm:$0xff]
    %v340 = vld [vmem:[#allocation2 + $0x50] sm:$0xff]
    %v341 = vld [vmem:[#allocation2 + $0x58] sm:$0xff]
    %v342 = vld [vmem:[#allocation2 + $0x60] sm:$0xff]
    %v343 = vld [vmem:[#allocation2 + $0x68] sm:$0xff]
    %v344 = vld [vmem:[#allocation2 + $0x70] sm:$0xff]
    %v345 = vld [vmem:[#allocation2 + $0x78] sm:$0xff]
    %347 = vset.pattern.permute.xlu0 0
    %348 = vperm.xlu0 %347, %v314
    %v349 = vpop.permute.xlu0 %348
    %352 = vset.pattern.permute.xlu0 0
    %353 = vperm.xlu0 %352, %v315
    %v354 = vpop.permute.xlu0 %353
    %357 = vset.pattern.permute.xlu0 0
    %358 = vperm.xlu0 %357, %v316
    %v359 = vpop.permute.xlu0 %358
    %362 = vset.pattern.permute.xlu0 0
    %363 = vperm.xlu0 %362, %v317
    %v364 = vpop.permute.xlu0 %363
    %367 = vset.pattern.permute.xlu0 0
    %368 = vperm.xlu0 %367, %v318
    %v369 = vpop.permute.xlu0 %368
    %372 = vset.pattern.permute.xlu0 0
    %373 = vperm.xlu0 %372, %v319
    %v374 = vpop.permute.xlu0 %373
    %377 = vset.pattern.permute.xlu0 0
    %378 = vperm.xlu0 %377, %v320
    %v379 = vpop.permute.xlu0 %378
    %382 = vset.pattern.permute.xlu0 0
    %383 = vperm.xlu0 %382, %v321
    %v384 = vpop.permute.xlu0 %383
    %387 = vset.pattern.permute.xlu0 0
    %388 = vperm.xlu0 %387, %v322
    %v389 = vpop.permute.xlu0 %388
    %392 = vset.pattern.permute.xlu0 0
    %393 = vperm.xlu0 %392, %v323
    %v394 = vpop.permute.xlu0 %393
    %397 = vset.pattern.permute.xlu0 0
    %398 = vperm.xlu0 %397, %v324
    %v399 = vpop.permute.xlu0 %398
    %402 = vset.pattern.permute.xlu0 0
    %403 = vperm.xlu0 %402, %v325
    %v404 = vpop.permute.xlu0 %403
    %407 = vset.pattern.permute.xlu0 0
    %408 = vperm.xlu0 %407, %v326
    %v409 = vpop.permute.xlu0 %408
    %412 = vset.pattern.permute.xlu0 0
    %413 = vperm.xlu0 %412, %v327
    %v414 = vpop.permute.xlu0 %413
    %417 = vset.pattern.permute.xlu0 0
    %418 = vperm.xlu0 %417, %v328
    %v419 = vpop.permute.xlu0 %418
    %422 = vset.pattern.permute.xlu0 0
    %423 = vperm.xlu0 %422, %v329
    %v424 = vpop.permute.xlu0 %423
    %v426 = vmul.f32 %v349, %v330
    %v427 = vmul.f32 %v354, %v331
    %v428 = vmul.f32 %v359, %v332
    %v429 = vmul.f32 %v364, %v333
    %v430 = vmul.f32 %v369, %v334
    %v431 = vmul.f32 %v374, %v335
    %v432 = vmul.f32 %v379, %v336
    %v433 = vmul.f32 %v384, %v337
    %v434 = vmul.f32 %v389, %v338
    %v435 = vmul.f32 %v394, %v339
    %v436 = vmul.f32 %v399, %v340
    %v437 = vmul.f32 %v404, %v341
    %v438 = vmul.f32 %v409, %v342
    %v439 = vmul.f32 %v414, %v343
    %v440 = vmul.f32 %v419, %v344
    %v441 = vmul.f32 %v424, %v345
    %v442 = vld [vmem:[%s3] sm:$0x1]
    %v444 = vlaneseq
    %v445 = vshrl.u32 %v444, 7
    %v446 = vsub.s32 0, %v445
    %v447 = vrot.slane %v442, %v446
    %v449 = vadd.f32 %v426, %v447
    %v450 = vadd.f32 %v427, %v447
    %v451 = vadd.f32 %v428, %v447
    %v452 = vadd.f32 %v429, %v447
    %v453 = vadd.f32 %v430, %v447
    %v454 = vadd.f32 %v431, %v447
    %v455 = vadd.f32 %v432, %v447
    %v456 = vadd.f32 %v433, %v447
    %v457 = vadd.f32 %v434, %v447
    %v458 = vadd.f32 %v435, %v447
    %v459 = vadd.f32 %v436, %v447
    %v460 = vadd.f32 %v437, %v447
    %v461 = vadd.f32 %v438, %v447
    %v462 = vadd.f32 %v439, %v447
    %v463 = vadd.f32 %v440, %v447
    %v464 = vadd.f32 %v441, %v447
    %v465 = vmax.f32 %v449, 0.0
    %v466 = vmax.f32 %v450, 0.0
    %v467 = vmax.f32 %v451, 0.0
    %v468 = vmax.f32 %v452, 0.0
    %v469 = vmax.f32 %v453, 0.0
    %v470 = vmax.f32 %v454, 0.0
    %v471 = vmax.f32 %v455, 0.0
    %v472 = vmax.f32 %v456, 0.0
    %v473 = vmax.f32 %v457, 0.0
    %v474 = vmax.f32 %v458, 0.0
    %v475 = vmax.f32 %v459, 0.0
    %v476 = vmax.f32 %v460, 0.0
    %v477 = vmax.f32 %v461, 0.0
    %v478 = vmax.f32 %v462, 0.0
    %v479 = vmax.f32 %v463, 0.0
    %v480 = vmax.f32 %v464, 0.0
    %481 = vst [vmem:[%s4] sm:$0xff] %v465
    %482 = vst [vmem:[%s4 + $0x8] sm:$0xff] %v466
    %483 = vst [vmem:[%s4 + $0x10] sm:$0xff] %v467
    %484 = vst [vmem:[%s4 + $0x18] sm:$0xff] %v468
    %485 = vst [vmem:[%s4 + $0x20] sm:$0xff] %v469
    %486 = vst [vmem:[%s4 + $0x28] sm:$0xff] %v470
    %487 = vst [vmem:[%s4 + $0x30] sm:$0xff] %v471
    %488 = vst [vmem:[%s4 + $0x38] sm:$0xff] %v472
    %489 = vst [vmem:[%s4 + $0x40] sm:$0xff] %v473
    %490 = vst [vmem:[%s4 + $0x48] sm:$0xff] %v474
    %491 = vst [vmem:[%s4 + $0x50] sm:$0xff] %v475
    %492 = vst [vmem:[%s4 + $0x58] sm:$0xff] %v476
    %493 = vst [vmem:[%s4 + $0x60] sm:$0xff] %v477
    %494 = vst [vmem:[%s4 + $0x68] sm:$0xff] %v478
    %495 = vst [vmem:[%s4 + $0x70] sm:$0xff] %v479
    %496 = vst [vmem:[%s4 + $0x78] sm:$0xff] %v480
  $region25: #{agl_mgae_forward.11} parent=0 // pred_fallthru
    _
  // Predicated region
  $region26: #{agl_mgae_forward.11} parent=0 // pred_check
    _
  $region27: #{agl_mgae_forward.11} parent=0 // pred_check_branch
    %498 = sbr.rel (0) target = $region29
  $region28: #{agl_mgae_forward.11} parent=0 // pred_region
    _
  $region29: #{agl_mgae_forward.11} parent=0 // pred_fallthru
    _
  // Predicated region
  $region30: #{agl_mgae_forward.11} parent=0 // pred_check
    _
  $region31: #{agl_mgae_forward.11} parent=0 // pred_check_branch
    %500 = sbr.rel (0) target = $region33
  $region32: #{agl_mgae_forward.11} parent=0 // pred_region
    _
  $region33: #{agl_mgae_forward.11} parent=0 // pred_fallthru
    _

// kernel: agl_mgae_forward.13
$region0: #{agl_mgae_forward.13}
  #allocation0 [shape = 'u32[]', space=smem, size = 0x4, offset = 0x4, fixed_abs, tag = 'smem constant byte address 0x4 - core index']
  #allocation1 [shape = 'u32[144,128]{1,0:T(1,128)}', space=vmem, size = 0x12000, scoped, tag = 'internal scratch']
  #allocation2 [shape = 'f32[128,128]{1,0:T(8,128)}', space=vmem, size = 0x10000, scoped, tag = 'scratch operand']
  %s0 = inlined_call_operand.vmem [shape: bf16[128,128], index: 0, kind: input, shape index: {}]
  %s1 = inlined_call_operand.vmem [shape: bf16[128,128], index: 1, kind: input, shape index: {}]
  %s2 = inlined_call_operand.vmem [shape: f32[128,1], index: 2, kind: input, shape index: {}]
  %s3 = inlined_call_operand.vmem [shape: f32[1,128], index: 3, kind: input, shape index: {}]
  %s4 = inlined_call_operand.vmem [shape: f32[128,128], index: 4, kind: output, shape index: {}]
  %s5 = sld [smem:[#allocation0]]
  $region34: #{agl_mgae_forward.13} parent=0
    _
  %s7 = ssub.s32 1, %s5
  %s8 = scalar_select 0, %s7, %s5
  // Predicated region
  $region2: #{agl_mgae_forward.13} parent=0 // pred_check
    _
  $region3: #{agl_mgae_forward.13} parent=0 // pred_check_branch
    %10 = sbr.rel (0) target = $region5
  $region4: #{agl_mgae_forward.13} parent=0 // pred_region
    _
  $region5: #{agl_mgae_forward.13} parent=0 // pred_fallthru
    _
  // Predicated region
  $region6: #{agl_mgae_forward.13} parent=0 // pred_check
    _
  $region7: #{agl_mgae_forward.13} parent=0 // pred_check_branch
    %12 = sbr.rel (0) target = $region9
  $region8: #{agl_mgae_forward.13} parent=0 // pred_region
    _
  $region9: #{agl_mgae_forward.13} parent=0 // pred_fallthru
    _
  // Predicated region
  $region10: #{agl_mgae_forward.13} parent=0 // pred_check
    _
  $region11: #{agl_mgae_forward.13} parent=0 // pred_check_branch
    %14 = sbr.rel (0) target = $region13
  $region12: #{agl_mgae_forward.13} parent=0 // pred_region
    _
  $region13: #{agl_mgae_forward.13} parent=0 // pred_fallthru
    _
  // Predicated region
  $region14: #{agl_mgae_forward.13} parent=0 // pred_check
    _
  $region15: #{agl_mgae_forward.13} parent=0 // pred_check_branch
    %16 = sbr.rel (0) target = $region17
  $region16: #{agl_mgae_forward.13} parent=0 // pred_region
    _
  $region17: #{agl_mgae_forward.13} parent=0 // pred_fallthru
    _
  %p18 = scmp.eq.s32.totalorder 0, 0
  // Predicated region
  $region18: #{agl_mgae_forward.13} parent=0 // pred_check
    %p19 = pneg %p18
  $region19: #{agl_mgae_forward.13} parent=0 // pred_check_branch
    %21 = sbr.rel (%p19) target = $region21
  $region20: #{agl_mgae_forward.13} parent=0 // pred_region
    %22 = vst [vmem:[#allocation2] sm:$0xff] 0.0
    %23 = vst [vmem:[#allocation2 + $0x8] sm:$0xff] 0.0
    %24 = vst [vmem:[#allocation2 + $0x10] sm:$0xff] 0.0
    %25 = vst [vmem:[#allocation2 + $0x18] sm:$0xff] 0.0
    %26 = vst [vmem:[#allocation2 + $0x20] sm:$0xff] 0.0
    %27 = vst [vmem:[#allocation2 + $0x28] sm:$0xff] 0.0
    %28 = vst [vmem:[#allocation2 + $0x30] sm:$0xff] 0.0
    %29 = vst [vmem:[#allocation2 + $0x38] sm:$0xff] 0.0
    %30 = vst [vmem:[#allocation2 + $0x40] sm:$0xff] 0.0
    %31 = vst [vmem:[#allocation2 + $0x48] sm:$0xff] 0.0
    %32 = vst [vmem:[#allocation2 + $0x50] sm:$0xff] 0.0
    %33 = vst [vmem:[#allocation2 + $0x58] sm:$0xff] 0.0
    %34 = vst [vmem:[#allocation2 + $0x60] sm:$0xff] 0.0
    %35 = vst [vmem:[#allocation2 + $0x68] sm:$0xff] 0.0
    %36 = vst [vmem:[#allocation2 + $0x70] sm:$0xff] 0.0
    %37 = vst [vmem:[#allocation2 + $0x78] sm:$0xff] 0.0
  $region21: #{agl_mgae_forward.13} parent=0 // pred_fallthru
    _
  %v38 = vld [vmem:[#allocation2] sm:$0xff]
  %v39 = vld [vmem:[#allocation2 + $0x8] sm:$0xff]
  %v40 = vld [vmem:[#allocation2 + $0x10] sm:$0xff]
  %v41 = vld [vmem:[#allocation2 + $0x18] sm:$0xff]
  %v42 = vld [vmem:[#allocation2 + $0x20] sm:$0xff]
  %v43 = vld [vmem:[#allocation2 + $0x28] sm:$0xff]
  %v44 = vld [vmem:[#allocation2 + $0x30] sm:$0xff]
  %v45 = vld [vmem:[#allocation2 + $0x38] sm:$0xff]
  %v46 = vld [vmem:[#allocation2 + $0x40] sm:$0xff]
  %v47 = vld [vmem:[#allocation2 + $0x48] sm:$0xff]
  %v48 = vld [vmem:[#allocation2 + $0x50] sm:$0xff]
  %v49 = vld [vmem:[#allocation2 + $0x58] sm:$0xff]
  %v50 = vld [vmem:[#allocation2 + $0x60] sm:$0xff]
  %v51 = vld [vmem:[#allocation2 + $0x68] sm:$0xff]
  %v52 = vld [vmem:[#allocation2 + $0x70] sm:$0xff]
  %v53 = vld [vmem:[#allocation2 + $0x78] sm:$0xff]
  %v54 = vld [vmem:[%s0] sm:$0xf]
  %v55 = vld [vmem:[%s0 + $0x4] sm:$0xf]
  %v56 = vld [vmem:[%s0 + $0x8] sm:$0xf]
  %v57 = vld [vmem:[%s0 + $0xc] sm:$0xf]
  %v58 = vld [vmem:[%s0 + $0x10] sm:$0xf]
  %v59 = vld [vmem:[%s0 + $0x14] sm:$0xf]
  %v60 = vld [vmem:[%s0 + $0x18] sm:$0xf]
  %v61 = vld [vmem:[%s0 + $0x1c] sm:$0xf]
  %v62 = vld [vmem:[%s0 + $0x20] sm:$0xf]
  %v63 = vld [vmem:[%s0 + $0x24] sm:$0xf]
  %v64 = vld [vmem:[%s0 + $0x28] sm:$0xf]
  %v65 = vld [vmem:[%s0 + $0x2c] sm:$0xf]
  %v66 = vld [vmem:[%s0 + $0x30] sm:$0xf]
  %v67 = vld [vmem:[%s0 + $0x34] sm:$0xf]
  %v68 = vld [vmem:[%s0 + $0x38] sm:$0xf]
  %v69 = vld [vmem:[%s0 + $0x3c] sm:$0xf]
  %v70 = vld [vmem:[%s1] sm:$0xf]
  %v71 = vld [vmem:[%s1 + $0x4] sm:$0xf]
  %v72 = vld [vmem:[%s1 + $0x8] sm:$0xf]
  %v73 = vld [vmem:[%s1 + $0xc] sm:$0xf]
  %v74 = vld [vmem:[%s1 + $0x10] sm:$0xf]
  %v75 = vld [vmem:[%s1 + $0x14] sm:$0xf]
  %v76 = vld [vmem:[%s1 + $0x18] sm:$0xf]
  %v77 = vld [vmem:[%s1 + $0x1c] sm:$0xf]
  %v78 = vld [vmem:[%s1 + $0x20] sm:$0xf]
  %v79 = vld [vmem:[%s1 + $0x24] sm:$0xf]
  %v80 = vld [vmem:[%s1 + $0x28] sm:$0xf]
  %v81 = vld [vmem:[%s1 + $0x2c] sm:$0xf]
  %v82 = vld [vmem:[%s1 + $0x30] sm:$0xf]
  %v83 = vld [vmem:[%s1 + $0x34] sm:$0xf]
  %v84 = vld [vmem:[%s1 + $0x38] sm:$0xf]
  %v85 = vld [vmem:[%s1 + $0x3c] sm:$0xf]
  %v102 = vunpack.c.l.b16 %v54
  %v103 = vunpack.c.l.b16 %v55
  %v104 = vunpack.c.l.b16 %v56
  %v105 = vunpack.c.l.b16 %v57
  %v106 = vunpack.c.l.b16 %v58
  %v107 = vunpack.c.l.b16 %v59
  %v108 = vunpack.c.l.b16 %v60
  %v109 = vunpack.c.l.b16 %v61
  %v110 = vunpack.c.l.b16 %v62
  %v111 = vunpack.c.l.b16 %v63
  %v112 = vunpack.c.l.b16 %v64
  %v113 = vunpack.c.l.b16 %v65
  %v114 = vunpack.c.l.b16 %v66
  %v115 = vunpack.c.l.b16 %v67
  %v116 = vunpack.c.l.b16 %v68
  %v117 = vunpack.c.l.b16 %v69
  %v118 = vpack.c.b16 %v103, %v102
  %v119 = vpack.c.b16 %v105, %v104
  %v120 = vpack.c.b16 %v107, %v106
  %v121 = vpack.c.b16 %v109, %v108
  %v122 = vpack.c.b16 %v111, %v110
  %v123 = vpack.c.b16 %v113, %v112
  %v124 = vpack.c.b16 %v115, %v114
  %v125 = vpack.c.b16 %v117, %v116
  %v150 = vunpack.c.l.b16 %v70
  %v151 = vunpack.c.l.b16 %v71
  %v152 = vunpack.c.l.b16 %v72
  %v153 = vunpack.c.l.b16 %v73
  %v154 = vunpack.c.l.b16 %v74
  %v155 = vunpack.c.l.b16 %v75
  %v156 = vunpack.c.l.b16 %v76
  %v157 = vunpack.c.l.b16 %v77
  %v158 = vunpack.c.l.b16 %v78
  %v159 = vunpack.c.l.b16 %v79
  %v160 = vunpack.c.l.b16 %v80
  %v161 = vunpack.c.l.b16 %v81
  %v162 = vunpack.c.l.b16 %v82
  %v163 = vunpack.c.l.b16 %v83
  %v164 = vunpack.c.l.b16 %v84
  %v165 = vunpack.c.l.b16 %v85
  %v166 = vpack.c.b16 %v151, %v150
  %v167 = vpack.c.b16 %v153, %v152
  %v168 = vpack.c.b16 %v155, %v154
  %v169 = vpack.c.b16 %v157, %v156
  %v170 = vpack.c.b16 %v159, %v158
  %v171 = vpack.c.b16 %v161, %v160
  %v172 = vpack.c.b16 %v163, %v162
  %v173 = vpack.c.b16 %v165, %v164
  %182 = vmatprep.subr.bf16.mxu0 0
  %183 = vmatpush1.bf16.msra.mxu0 %v166
  %184 = vmatprep.subr.bf16.mxu0 0
  %185 = vmatpush1.bf16.msra.mxu0 %v167
  %186 = vmatprep.subr.bf16.mxu0 0
  %187 = vmatpush1.bf16.msra.mxu0 %v168
  %188 = vmatprep.subr.bf16.mxu0 0
  %189 = vmatpush1.bf16.msra.mxu0 %v169
  %190 = vmatprep.subr.bf16.mxu0 0
  %191 = vmatpush1.bf16.msra.mxu0 %v170
  %192 = vmatprep.subr.bf16.mxu0 0
  %193 = vmatpush1.bf16.msra.mxu0 %v171
  %194 = vmatprep.subr.bf16.mxu0 0
  %195 = vmatpush1.bf16.msra.mxu0 %v172
  %196 = vmatprep.subr.bf16.mxu0 0
  %197 = vmatpush1.bf16.msra.mxu0 %v173
  %198 = vmatprep.subr.bf16.mxu0 0
  %199 = vmatpush1.bf16.msra.mxu0 0
  %200 = vmatprep.subr.bf16.mxu0 0
  %201 = vmatpush1.bf16.msra.mxu0 0
  %202 = vmatprep.subr.bf16.mxu0 0
  %203 = vmatpush1.bf16.msra.mxu0 0
  %204 = vmatprep.subr.bf16.mxu0 0
  %205 = vmatpush1.bf16.msra.mxu0 0
  %206 = vmatprep.subr.bf16.mxu0 0
  %207 = vmatpush1.bf16.msra.mxu0 0
  %208 = vmatprep.subr.bf16.mxu0 0
  %209 = vmatpush1.bf16.msra.mxu0 0
  %210 = vmatprep.subr.bf16.mxu0 0
  %211 = vmatpush1.bf16.msra.mxu0 0
  %212 = vmatprep.subr.bf16.mxu0 0
  %213 = vmatpush1.bf16.msra.mxu0 0
  %214 = vmatprep.mubr.bf16.mxu0 0
  %215 = vmatmul.mubr.bf16.gmra.mrb[0].mxu0 %v118
  %v216 = vpop.f32.mrb[0].mxu0
  %v217 = vadd.f32 0.0, %v216
  %v218 = vpop.f32.mrb[0].mxu0
  %v219 = vpop.f32.mrb[0].mxu0
  %v220 = vadd.f32 0.0, %v219
  %v221 = vpop.f32.mrb[0].mxu0
  %222 = vmatprep.mubr.bf16.mxu0 0
  %223 = vmatmul.mubr.bf16.gmra.mrb[0].mxu0 %v119
  %v224 = vpop.f32.mrb[0].mxu0
  %v225 = vadd.f32 0.0, %v224
  %v226 = vpop.f32.mrb[0].mxu0
  %v227 = vpop.f32.mrb[0].mxu0
  %v228 = vadd.f32 0.0, %v227
  %v229 = vpop.f32.mrb[0].mxu0
  %230 = vmatprep.mubr.bf16.mxu0 0
  %231 = vmatmul.mubr.bf16.gmra.mrb[0].mxu0 %v120
  %v232 = vpop.f32.mrb[0].mxu0
  %v233 = vadd.f32 0.0, %v232
  %v234 = vpop.f32.mrb[0].mxu0
  %v235 = vpop.f32.mrb[0].mxu0
  %v236 = vadd.f32 0.0, %v235
  %v237 = vpop.f32.mrb[0].mxu0
  %238 = vmatprep.mubr.bf16.mxu0 0
  %239 = vmatmul.mubr.bf16.gmra.mrb[0].mxu0 %v121
  %v240 = vpop.f32.mrb[0].mxu0
  %v241 = vadd.f32 0.0, %v240
  %v242 = vpop.f32.mrb[0].mxu0
  %v243 = vpop.f32.mrb[0].mxu0
  %v244 = vadd.f32 0.0, %v243
  %v245 = vpop.f32.mrb[0].mxu0
  %246 = vmatprep.mubr.bf16.mxu0 0
  %247 = vmatmul.mubr.bf16.gmra.mrb[0].mxu0 %v122
  %v248 = vpop.f32.mrb[0].mxu0
  %v249 = vadd.f32 0.0, %v248
  %v250 = vpop.f32.mrb[0].mxu0
  %v251 = vpop.f32.mrb[0].mxu0
  %v252 = vadd.f32 0.0, %v251
  %v253 = vpop.f32.mrb[0].mxu0
  %254 = vmatprep.mubr.bf16.mxu0 0
  %255 = vmatmul.mubr.bf16.gmra.mrb[0].mxu0 %v123
  %v256 = vpop.f32.mrb[0].mxu0
  %v257 = vadd.f32 0.0, %v256
  %v258 = vpop.f32.mrb[0].mxu0
  %v259 = vpop.f32.mrb[0].mxu0
  %v260 = vadd.f32 0.0, %v259
  %v261 = vpop.f32.mrb[0].mxu0
  %262 = vmatprep.mubr.bf16.mxu0 0
  %263 = vmatmul.mubr.bf16.gmra.mrb[0].mxu0 %v124
  %v264 = vpop.f32.mrb[0].mxu0
  %v265 = vadd.f32 0.0, %v264
  %v266 = vpop.f32.mrb[0].mxu0
  %v267 = vpop.f32.mrb[0].mxu0
  %v268 = vadd.f32 0.0, %v267
  %v269 = vpop.f32.mrb[0].mxu0
  %270 = vmatprep.mubr.bf16.mxu0 0
  %271 = vmatmul.mubr.bf16.gmra.mrb[0].mxu0 %v125
  %v272 = vpop.f32.mrb[0].mxu0
  %v273 = vadd.f32 0.0, %v272
  %v274 = vpop.f32.mrb[0].mxu0
  %v275 = vpop.f32.mrb[0].mxu0
  %v276 = vadd.f32 0.0, %v275
  %v277 = vpop.f32.mrb[0].mxu0
  %278 = vdwg.mxu0
  %v279 = vadd.f32 %v38, %v217
  %v280 = vadd.f32 %v39, %v220
  %v281 = vadd.f32 %v40, %v225
  %v282 = vadd.f32 %v41, %v228
  %v283 = vadd.f32 %v42, %v233
  %v284 = vadd.f32 %v43, %v236
  %v285 = vadd.f32 %v44, %v241
  %v286 = vadd.f32 %v45, %v244
  %v287 = vadd.f32 %v46, %v249
  %v288 = vadd.f32 %v47, %v252
  %v289 = vadd.f32 %v48, %v257
  %v290 = vadd.f32 %v49, %v260
  %v291 = vadd.f32 %v50, %v265
  %v292 = vadd.f32 %v51, %v268
  %v293 = vadd.f32 %v52, %v273
  %v294 = vadd.f32 %v53, %v276
  %295 = vst [vmem:[#allocation2] sm:$0xff] %v279
  %296 = vst [vmem:[#allocation2 + $0x8] sm:$0xff] %v280
  %297 = vst [vmem:[#allocation2 + $0x10] sm:$0xff] %v281
  %298 = vst [vmem:[#allocation2 + $0x18] sm:$0xff] %v282
  %299 = vst [vmem:[#allocation2 + $0x20] sm:$0xff] %v283
  %300 = vst [vmem:[#allocation2 + $0x28] sm:$0xff] %v284
  %301 = vst [vmem:[#allocation2 + $0x30] sm:$0xff] %v285
  %302 = vst [vmem:[#allocation2 + $0x38] sm:$0xff] %v286
  %303 = vst [vmem:[#allocation2 + $0x40] sm:$0xff] %v287
  %304 = vst [vmem:[#allocation2 + $0x48] sm:$0xff] %v288
  %305 = vst [vmem:[#allocation2 + $0x50] sm:$0xff] %v289
  %306 = vst [vmem:[#allocation2 + $0x58] sm:$0xff] %v290
  %307 = vst [vmem:[#allocation2 + $0x60] sm:$0xff] %v291
  %308 = vst [vmem:[#allocation2 + $0x68] sm:$0xff] %v292
  %309 = vst [vmem:[#allocation2 + $0x70] sm:$0xff] %v293
  %310 = vst [vmem:[#allocation2 + $0x78] sm:$0xff] %v294
  // Predicated region
  $region22: #{agl_mgae_forward.13} parent=0 // pred_check
    %p311 = pneg %p18
  $region23: #{agl_mgae_forward.13} parent=0 // pred_check_branch
    %313 = sbr.rel (%p311) target = $region25
  $region24: #{agl_mgae_forward.13} parent=0 // pred_region
    %v314 = vld [vmem:[%s2] sm:$0xff]
    %v315 = vld [vmem:[%s2 + $0x8] sm:$0xff]
    %v316 = vld [vmem:[%s2 + $0x10] sm:$0xff]
    %v317 = vld [vmem:[%s2 + $0x18] sm:$0xff]
    %v318 = vld [vmem:[%s2 + $0x20] sm:$0xff]
    %v319 = vld [vmem:[%s2 + $0x28] sm:$0xff]
    %v320 = vld [vmem:[%s2 + $0x30] sm:$0xff]
    %v321 = vld [vmem:[%s2 + $0x38] sm:$0xff]
    %v322 = vld [vmem:[%s2 + $0x40] sm:$0xff]
    %v323 = vld [vmem:[%s2 + $0x48] sm:$0xff]
    %v324 = vld [vmem:[%s2 + $0x50] sm:$0xff]
    %v325 = vld [vmem:[%s2 + $0x58] sm:$0xff]
    %v326 = vld [vmem:[%s2 + $0x60] sm:$0xff]
    %v327 = vld [vmem:[%s2 + $0x68] sm:$0xff]
    %v328 = vld [vmem:[%s2 + $0x70] sm:$0xff]
    %v329 = vld [vmem:[%s2 + $0x78] sm:$0xff]
    %v330 = vld [vmem:[#allocation2] sm:$0xff]
    %v331 = vld [vmem:[#allocation2 + $0x8] sm:$0xff]
    %v332 = vld [vmem:[#allocation2 + $0x10] sm:$0xff]
    %v333 = vld [vmem:[#allocation2 + $0x18] sm:$0xff]
    %v334 = vld [vmem:[#allocation2 + $0x20] sm:$0xff]
    %v335 = vld [vmem:[#allocation2 + $0x28] sm:$0xff]
    %v336 = vld [vmem:[#allocation2 + $0x30] sm:$0xff]
    %v337 = vld [vmem:[#allocation2 + $0x38] sm:$0xff]
    %v338 = vld [vmem:[#allocation2 + $0x40] sm:$0xff]
    %v339 = vld [vmem:[#allocation2 + $0x48] sm:$0xff]
    %v340 = vld [vmem:[#allocation2 + $0x50] sm:$0xff]
    %v341 = vld [vmem:[#allocation2 + $0x58] sm:$0xff]
    %v342 = vld [vmem:[#allocation2 + $0x60] sm:$0xff]
    %v343 = vld [vmem:[#allocation2 + $0x68] sm:$0xff]
    %v344 = vld [vmem:[#allocation2 + $0x70] sm:$0xff]
    %v345 = vld [vmem:[#allocation2 + $0x78] sm:$0xff]
    %347 = vset.pattern.permute.xlu0 0
    %348 = vperm.xlu0 %347, %v314
    %v349 = vpop.permute.xlu0 %348
    %352 = vset.pattern.permute.xlu0 0
    %353 = vperm.xlu0 %352, %v315
    %v354 = vpop.permute.xlu0 %353
    %357 = vset.pattern.permute.xlu0 0
    %358 = vperm.xlu0 %357, %v316
    %v359 = vpop.permute.xlu0 %358
    %362 = vset.pattern.permute.xlu0 0
    %363 = vperm.xlu0 %362, %v317
    %v364 = vpop.permute.xlu0 %363
    %367 = vset.pattern.permute.xlu0 0
    %368 = vperm.xlu0 %367, %v318
    %v369 = vpop.permute.xlu0 %368
    %372 = vset.pattern.permute.xlu0 0
    %373 = vperm.xlu0 %372, %v319
    %v374 = vpop.permute.xlu0 %373
    %377 = vset.pattern.permute.xlu0 0
    %378 = vperm.xlu0 %377, %v320
    %v379 = vpop.permute.xlu0 %378
    %382 = vset.pattern.permute.xlu0 0
    %383 = vperm.xlu0 %382, %v321
    %v384 = vpop.permute.xlu0 %383
    %387 = vset.pattern.permute.xlu0 0
    %388 = vperm.xlu0 %387, %v322
    %v389 = vpop.permute.xlu0 %388
    %392 = vset.pattern.permute.xlu0 0
    %393 = vperm.xlu0 %392, %v323
    %v394 = vpop.permute.xlu0 %393
    %397 = vset.pattern.permute.xlu0 0
    %398 = vperm.xlu0 %397, %v324
    %v399 = vpop.permute.xlu0 %398
    %402 = vset.pattern.permute.xlu0 0
    %403 = vperm.xlu0 %402, %v325
    %v404 = vpop.permute.xlu0 %403
    %407 = vset.pattern.permute.xlu0 0
    %408 = vperm.xlu0 %407, %v326
    %v409 = vpop.permute.xlu0 %408
    %412 = vset.pattern.permute.xlu0 0
    %413 = vperm.xlu0 %412, %v327
    %v414 = vpop.permute.xlu0 %413
    %417 = vset.pattern.permute.xlu0 0
    %418 = vperm.xlu0 %417, %v328
    %v419 = vpop.permute.xlu0 %418
    %422 = vset.pattern.permute.xlu0 0
    %423 = vperm.xlu0 %422, %v329
    %v424 = vpop.permute.xlu0 %423
    %v426 = vmul.f32 %v349, %v330
    %v427 = vmul.f32 %v354, %v331
    %v428 = vmul.f32 %v359, %v332
    %v429 = vmul.f32 %v364, %v333
    %v430 = vmul.f32 %v369, %v334
    %v431 = vmul.f32 %v374, %v335
    %v432 = vmul.f32 %v379, %v336
    %v433 = vmul.f32 %v384, %v337
    %v434 = vmul.f32 %v389, %v338
    %v435 = vmul.f32 %v394, %v339
    %v436 = vmul.f32 %v399, %v340
    %v437 = vmul.f32 %v404, %v341
    %v438 = vmul.f32 %v409, %v342
    %v439 = vmul.f32 %v414, %v343
    %v440 = vmul.f32 %v419, %v344
    %v441 = vmul.f32 %v424, %v345
    %v442 = vld [vmem:[%s3] sm:$0x1]
    %v444 = vlaneseq
    %v445 = vshrl.u32 %v444, 7
    %v446 = vsub.s32 0, %v445
    %v447 = vrot.slane %v442, %v446
    %v449 = vadd.f32 %v426, %v447
    %v450 = vadd.f32 %v427, %v447
    %v451 = vadd.f32 %v428, %v447
    %v452 = vadd.f32 %v429, %v447
    %v453 = vadd.f32 %v430, %v447
    %v454 = vadd.f32 %v431, %v447
    %v455 = vadd.f32 %v432, %v447
    %v456 = vadd.f32 %v433, %v447
    %v457 = vadd.f32 %v434, %v447
    %v458 = vadd.f32 %v435, %v447
    %v459 = vadd.f32 %v436, %v447
    %v460 = vadd.f32 %v437, %v447
    %v461 = vadd.f32 %v438, %v447
    %v462 = vadd.f32 %v439, %v447
    %v463 = vadd.f32 %v440, %v447
    %v464 = vadd.f32 %v441, %v447
    %465 = vst [vmem:[%s4] sm:$0xff] %v449
    %466 = vst [vmem:[%s4 + $0x8] sm:$0xff] %v450
    %467 = vst [vmem:[%s4 + $0x10] sm:$0xff] %v451
    %468 = vst [vmem:[%s4 + $0x18] sm:$0xff] %v452
    %469 = vst [vmem:[%s4 + $0x20] sm:$0xff] %v453
    %470 = vst [vmem:[%s4 + $0x28] sm:$0xff] %v454
    %471 = vst [vmem:[%s4 + $0x30] sm:$0xff] %v455
    %472 = vst [vmem:[%s4 + $0x38] sm:$0xff] %v456
    %473 = vst [vmem:[%s4 + $0x40] sm:$0xff] %v457
    %474 = vst [vmem:[%s4 + $0x48] sm:$0xff] %v458
    %475 = vst [vmem:[%s4 + $0x50] sm:$0xff] %v459
    %476 = vst [vmem:[%s4 + $0x58] sm:$0xff] %v460
    %477 = vst [vmem:[%s4 + $0x60] sm:$0xff] %v461
    %478 = vst [vmem:[%s4 + $0x68] sm:$0xff] %v462
    %479 = vst [vmem:[%s4 + $0x70] sm:$0xff] %v463
    %480 = vst [vmem:[%s4 + $0x78] sm:$0xff] %v464
  $region25: #{agl_mgae_forward.13} parent=0 // pred_fallthru
    _
  // Predicated region
  $region26: #{agl_mgae_forward.13} parent=0 // pred_check
    _
  $region27: #{agl_mgae_forward.13} parent=0 // pred_check_branch
    %482 = sbr.rel (0) target = $region29
  $region28: #{agl_mgae_forward.13} parent=0 // pred_region
    _
  $region29: #{agl_mgae_forward.13} parent=0 // pred_fallthru
    _
  // Predicated region
  $region30: #{agl_mgae_forward.13} parent=0 // pred_check
    _
  $region31: #{agl_mgae_forward.13} parent=0 // pred_check_branch
    %484 = sbr.rel (0) target = $region33
  $region32: #{agl_mgae_forward.13} parent=0 // pred_region
    _
  $region33: #{agl_mgae_forward.13} parent=0 // pred_fallthru
    _

</llo_original>
